<compile_context>
chip_gen: v7x
topology: tpu7x:2x2x1
jax: 0.10.0
libtpu: 0.0.40
codegen_flags: <defaults>
</compile_context>

<pallas_src>
import functools
import math

import jax
import jax.numpy as jnp
from jax import lax
from jax.experimental import pallas as pl
from jax.experimental.pallas import tpu as pltpu

LOG_SQRT_2PI = math.log(math.sqrt(2.0 * math.pi))


def _round_up(v, m):
    return ((v + m - 1) // m) * m


def _softplus(x):
    # numerically stable log(1 + exp(x)) (matches torch.nn.functional.softplus)
    return jnp.maximum(x, 0.0) + jnp.log1p(jnp.exp(-jnp.abs(x)))


# ---------------------------------------------------------------------------
# Fused kernel: sample weights/bias on the fly, matmul, and log-prob reductions
# ---------------------------------------------------------------------------
def _fused_bayes_linear_kernel(
        x_ref, wmu_ref, wrho_ref, weps_ref, bmu_ref, brho_ref, beps_ref,
        out_ref, prior_ref, post_ref, acc_ref,
        *, out_dim, in_dim, tn, tk, log_w1, log_w2, inv_s1, inv_s2, sample):
    i = pl.program_id(0)      # batch tile
    j = pl.program_id(1)      # out-dim tile
    k = pl.program_id(2)      # in-dim (reduction) tile
    nk = pl.num_programs(2)

    # ---- init once per (i, j) output tile, at the start of the k reduction ----
    @pl.when(k == 0)
    def _init():
        acc_ref[...] = jnp.zeros_like(acc_ref)
        prior_ref[...] = jnp.zeros_like(prior_ref)
        post_ref[...] = jnp.zeros_like(post_ref)

    mu = wmu_ref[...]
    if sample:
        rho = wrho_ref[...]
        eps = weps_ref[...]
        sigma = _softplus(rho)
        w = mu + sigma * eps          # reparameterized weight tile, never hits HBM
    else:
        w = mu

    # x:(tm,tk) contracted with w:(tn,tk) on their last dims -> (tm,tn); no .T
    acc_ref[...] += lax.dot_general(
        x_ref[...], w,
        dimension_numbers=(((1,), (1,)), ((), ())),
        preferred_element_type=jnp.float32)

    if sample:
        # ---- weight log-probs: each weight element counted exactly once (i==0) ----
        @pl.when(i == 0)
        def _weight_logprob():
            row = lax.broadcasted_iota(jnp.int32, (tn, tk), 0) + j * tn
            col = lax.broadcasted_iota(jnp.int32, (tn, tk), 1) + k * tk
            valid = (row < out_dim) & (col < in_dim)

            # variational posterior: (w - mu)^2 / (2 sigma^2) == eps^2 / 2
            post = -LOG_SQRT_2PI - jnp.log(sigma) - 0.5 * eps * eps
            # scale-mixture prior in log space (stable 2-term logsumexp)
            t1 = log_w1 - 0.5 * jnp.square(w * inv_s1)
            t2 = log_w2 - 0.5 * jnp.square(w * inv_s2)
            prior = jnp.maximum(t1, t2) + jnp.log1p(jnp.exp(-jnp.abs(t1 - t2)))

            prior_ref[...] += jnp.sum(jnp.where(valid, prior, 0.0))
            post_ref[...] += jnp.sum(jnp.where(valid, post, 0.0))

        # ---- bias log-probs: once per out tile j (i == 0, k == 0) ----
        @pl.when((i == 0) & (k == 0))
        def _bias_logprob():
            bmu = bmu_ref[...]
            brho = brho_ref[...]
            beps = beps_ref[...]
            bsigma = _softplus(brho)
            b = bmu + bsigma * beps
            lane = lax.broadcasted_iota(jnp.int32, (1, tn), 1) + j * tn
            bvalid = lane < out_dim

            bpost = -LOG_SQRT_2PI - jnp.log(bsigma) - 0.5 * beps * beps
            t1 = log_w1 - 0.5 * jnp.square(b * inv_s1)
            t2 = log_w2 - 0.5 * jnp.square(b * inv_s2)
            bprior = jnp.maximum(t1, t2) + jnp.log1p(jnp.exp(-jnp.abs(t1 - t2)))

            prior_ref[...] += jnp.sum(jnp.where(bvalid, bprior, 0.0))
            post_ref[...] += jnp.sum(jnp.where(bvalid, bpost, 0.0))

    # ---- epilogue: add (sampled) bias and write lane-dense output tile ----
    @pl.when(k == nk - 1)
    def _finish():
        bmu = bmu_ref[...]
        if sample:
            b = bmu + _softplus(brho_ref[...]) * beps_ref[...]
        else:
            b = bmu
        out_ref[...] = (acc_ref[...] + b).astype(out_ref.dtype)


# ---------------------------------------------------------------------------
# Wrapper
# ---------------------------------------------------------------------------
def _pick_tiles(batch, out_dim, in_dim):
    # 128-aligned N/K tiles work on all generations (v5e MXU is 128-wide); 256/512
    # caps keep the double-buffered footprint far below v7x's 64 MiB VMEM.
    tm = min(128, _round_up(batch, 8))
    tn = min(256, _round_up(out_dim, 128))
    tk = min(512, _round_up(in_dim, 128))
    return tm, tn, tk


def _pad2(a, rows, cols):
    return jnp.pad(a, ((0, rows - a.shape[0]), (0, cols - a.shape[1])))


def bayesian_linear_forward(x, weight_mu, weight_rho, bias_mu, bias_rho,
                            eps_w, eps_b, *, sample=True,
                            pi=0.5, sigma_1=0.0, sigma_2=-6.0):
    """BayesianLinear.forward. Returns (out, log_prior, log_variational_posterior)."""
    batch, in_dim = x.shape
    out_dim = weight_mu.shape[0]
    sample = bool(sample)

    tm, tn, tk = _pick_tiles(batch, out_dim, in_dim)
    bp, op, ip = _round_up(batch, tm), _round_up(out_dim, tn), _round_up(in_dim, tk)
    nbi, nbj, nbk = bp // tm, op // tn, ip // tk

    # Zero-pad to tile multiples (padded eps/mu are zero => padded w == 0, and the
    # log-prob sums are explicitly masked in-kernel, so padding contributes nothing).
    xp = _pad2(x, bp, ip)
    wmu = _pad2(weight_mu, op, ip)
    wrho = _pad2(weight_rho, op, ip)
    weps = _pad2(eps_w, op, ip)
    bmu = _pad2(bias_mu.reshape(1, -1), 1, op)
    brho = _pad2(bias_rho.reshape(1, -1), 1, op)
    beps = _pad2(eps_b.reshape(1, -1), 1, op)

    s1, s2 = math.exp(sigma_1), math.exp(sigma_2)
    norm = 1.0 / math.sqrt(2.0 * math.pi)
    log_w1 = math.log(pi) + math.log(norm / s1)
    log_w2 = math.log1p(-pi) + math.log(norm / s2)

    kern = functools.partial(
        _fused_bayes_linear_kernel,
        out_dim=out_dim, in_dim=in_dim, tn=tn, tk=tk,
        log_w1=log_w1, log_w2=log_w2, inv_s1=1.0 / s1, inv_s2=1.0 / s2,
        sample=sample)

    # Per-step VMEM footprint (double-buffered ins/outs + f32 accumulator) + headroom.
    tile_bytes = 4 * (2 * (tm * tk + 3 * tn * tk + 3 * tn + tm * tn + 2 * 8 * 128)
                      + tm * tn)
    vmem_limit = int(max(2 * tile_bytes, 16 * 1024 * 1024))

    grid_spec = pltpu.PrefetchScalarGridSpec(
        num_scalar_prefetch=0,
        grid=(nbi, nbj, nbk),
        in_specs=[
            pl.BlockSpec((tm, tk), lambda i, j, k: (i, k)),   # x
            pl.BlockSpec((tn, tk), lambda i, j, k: (j, k)),   # weight_mu
            pl.BlockSpec((tn, tk), lambda i, j, k: (j, k)),   # weight_rho
            pl.BlockSpec((tn, tk), lambda i, j, k: (j, k)),   # eps_w
            pl.BlockSpec((1, tn), lambda i, j, k: (0, j)),    # bias_mu
            pl.BlockSpec((1, tn), lambda i, j, k: (0, j)),    # bias_rho
            pl.BlockSpec((1, tn), lambda i, j, k: (0, j)),    # eps_b
        ],
        out_specs=(
            pl.BlockSpec((tm, tn), lambda i, j, k: (i, j)),   # out
            pl.BlockSpec((8, 128), lambda i, j, k: (i, j)),   # log-prior partials
            pl.BlockSpec((8, 128), lambda i, j, k: (i, j)),   # log-posterior partials
        ),
        scratch_shapes=[pltpu.VMEM((tm, tn), jnp.float32)],
    )

    out_p, prior_parts, post_parts = pl.pallas_call(
        kern,
        grid_spec=grid_spec,
        out_shape=(
            jax.ShapeDtypeStruct((bp, op), x.dtype),
            jax.ShapeDtypeStruct((nbi * 8, nbj * 128), jnp.float32),
            jax.ShapeDtypeStruct((nbi * 8, nbj * 128), jnp.float32),
        ),
        compiler_params=pltpu.CompilerParams(
            dimension_semantics=("parallel", "parallel", "arbitrary"),
            vmem_limit_bytes=vmem_limit),
        cost_estimate=pl.CostEstimate(
            flops=2 * bp * ip * op,
            transcendentals=(5 * op * ip) if sample else 0,
            bytes_accessed=4 * (bp * ip + 3 * op * ip * nbi + bp * op + 3 * op)),
    )(xp, wmu, wrho, weps, bmu, brho, beps)

    out = out_p[:batch, :out_dim]
    if sample:
        # One partial per (i, j) block lives at element (i*8, j*128); sum them.
        log_prior = jnp.sum(prior_parts[::8, ::128])
        log_var_post = jnp.sum(post_parts[::8, ::128])
    else:
        log_prior = jnp.float32(0.0)
        log_var_post = jnp.float32(0.0)
    return out, log_prior, log_var_post


# ---------------------------------------------------------------------------
# Pure-JAX reference (for correctness checking)
# ---------------------------------------------------------------------------
def _ref_forward(x, wmu, wrho, bmu, brho, eps_w, eps_b, pi, s1, s2):
    def softplus(r):
        return jnp.log1p(jnp.exp(r))

    def gauss_logprob(v, mu, sig):
        return jnp.sum(-LOG_SQRT_2PI - jnp.log(sig) - (v - mu) ** 2 / (2 * sig ** 2))

    def mix_logprob(v, pi, s1, s2):
        def pdf(v, s):
            return jnp.exp(-0.5 * (v / s) ** 2) / (s * math.sqrt(2 * math.pi))
        return jnp.sum(jnp.log(pi * pdf(v, s1) + (1 - pi) * pdf(v, s2)))

    wsig, bsig = softplus(wrho), softplus(brho)
    w = wmu + wsig * eps_w
    b = bmu + bsig * eps_b
    lp = mix_logprob(w, pi, s1, s2) + mix_logprob(b, pi, s1, s2)
    lvp = gauss_logprob(w, wmu, wsig) + gauss_logprob(b, bmu, bsig)
    return x @ w.T + b, lp, lvp


if __name__ == "__main__":
    # Small shapes consistent with a BayesianLinear(in_dim, out_dim) layer.
    batch, in_dim, out_dim = 8, 32, 16
    pi, sigma_1, sigma_2 = 0.5, 0.0, -6.0   # args.pi, args.sigma_1, args.sigma_2

    key = jax.random.PRNGKey(0)
    k = jax.random.split(key, 6)
    x = jax.random.normal(k[0], (batch, in_dim), dtype=jnp.float32)
    weight_mu = jax.random.uniform(k[1], (out_dim, in_dim), jnp.float32, -0.2, 0.2)
    weight_rho = jax.random.uniform(k[2], (out_dim, in_dim), jnp.float32, -5.0, -4.0)
    bias_mu = jax.random.uniform(k[3], (out_dim,), jnp.float32, -0.2, 0.2)
    bias_rho = jax.random.uniform(k[4], (out_dim,), jnp.float32, -5.0, -4.0)
    # TODO(synk): torch draws eps inside forward; here it is passed in explicitly so
    # the kernel is deterministic (pltpu.prng_* could generate it in-kernel instead).
    k5, k6 = jax.random.split(k[5])
    eps_w = jax.random.normal(k5, (out_dim, in_dim), dtype=jnp.float32)
    eps_b = jax.random.normal(k6, (out_dim,), dtype=jnp.float32)

    out, log_prior, log_var_post = bayesian_linear_forward(
        x, weight_mu, weight_rho, bias_mu, bias_rho, eps_w, eps_b,
        sample=True, pi=pi, sigma_1=sigma_1, sigma_2=sigma_2)
    out = jax.block_until_ready(out)
    log_prior = jax.block_until_ready(log_prior)
    log_var_post = jax.block_until_ready(log_var_post)

    # Check against a pure-JAX reference.
    ref_out, ref_lp, ref_lvp = _ref_forward(
        x, weight_mu, weight_rho, bias_mu, bias_rho, eps_w, eps_b,
        pi, math.exp(sigma_1), math.exp(sigma_2))
    assert jnp.allclose(out, ref_out, atol=1e-4, rtol=1e-4), "output mismatch"
    assert jnp.allclose(log_prior, ref_lp, atol=1e-2, rtol=1e-4), "log_prior mismatch"
    assert jnp.allclose(log_var_post, ref_lvp, atol=1e-2, rtol=1e-4), "log_posterior mismatch"

    # Non-sampling (eval) branch also exercised once.
    out_eval, lp0, lvp0 = bayesian_linear_forward(
        x, weight_mu, weight_rho, bias_mu, bias_rho, eps_w, eps_b, sample=False)
    out_eval = jax.block_until_ready(out_eval)
    assert jnp.allclose(out_eval, x @ weight_mu.T + bias_mu, atol=1e-4, rtol=1e-4)
    assert float(lp0) == 0.0 and float(lvp0) == 0.0

    print("KERNEL_OK")
</pallas_src>

<mosaic_0001>
module attributes {stable_mosaic.version = 11 : i64} {
  func.func @_fused_bayes_linear_kernel(%arg0: i32, %arg1: i32, %arg2: i32, %arg3: memref<8x128xf32, #tpu.memory_space<vmem>>, %arg4: memref<128x128xf32, #tpu.memory_space<vmem>>, %arg5: memref<128x128xf32, #tpu.memory_space<vmem>>, %arg6: memref<128x128xf32, #tpu.memory_space<vmem>>, %arg7: memref<1x128xf32, #tpu.memory_space<vmem>>, %arg8: memref<1x128xf32, #tpu.memory_space<vmem>>, %arg9: memref<1x128xf32, #tpu.memory_space<vmem>>, %arg10: memref<8x128xf32, #tpu.memory_space<vmem>>, %arg11: memref<8x128xf32, #tpu.memory_space<vmem>>, %arg12: memref<8x128xf32, #tpu.memory_space<vmem>>, %arg13: memref<8x128xf32, #tpu.memory_space<vmem>>) attributes {dimension_semantics = [#tpu.dimension_semantics<parallel>, #tpu.dimension_semantics<parallel>, #tpu.dimension_semantics<arbitrary>], iteration_bounds = array<i64: 1, 1, 1>, scalar_prefetch = 0 : i64, scratch_operands = 1 : i64, tpu.core_type = #tpu.core_type<tc>, window_params = [{transform_indices = @transform_0, window_bounds = array<i64: 8, 128>}, {transform_indices = @transform_1, window_bounds = array<i64: 128, 128>}, {transform_indices = @transform_2, window_bounds = array<i64: 128, 128>}, {transform_indices = @transform_3, window_bounds = array<i64: 128, 128>}, {transform_indices = @transform_4, window_bounds = array<i64: 1, 128>}, {transform_indices = @transform_5, window_bounds = array<i64: 1, 128>}, {transform_indices = @transform_6, window_bounds = array<i64: 1, 128>}, {transform_indices = @transform_7, window_bounds = array<i64: 8, 128>}, {transform_indices = @transform_8, window_bounds = array<i64: 8, 128>}, {transform_indices = @transform_9, window_bounds = array<i64: 8, 128>}]} {
    %c0_i32 = arith.constant 0 : i32
    %0 = arith.cmpi eq, %arg2, %c0_i32 : i32
    %1 = arith.extui %0 : i1 to i32
    %c0_i32_0 = arith.constant 0 : i32
    %2 = arith.cmpi ne, %1, %c0_i32_0 : i32
    scf.if %2 {
      %cst_21 = arith.constant 0.000000e+00 : f32
      %32 = vector.broadcast %cst_21 : f32 to vector<8x128xf32>
      %c0_22 = arith.constant 0 : index
      %c0_23 = arith.constant 0 : index
      %33 = vector.load %arg13[%c0_22, %c0_23] : memref<8x128xf32, #tpu.memory_space<vmem>>, vector<8x128xf32>
      tpu.vector_store %arg13[%c0_22, %c0_23], %32 {strides = array<i32>} : memref<8x128xf32, #tpu.memory_space<vmem>>, vector<8x128xf32>,
      %cst_24 = arith.constant 0.000000e+00 : f32
      %34 = vector.broadcast %cst_24 : f32 to vector<8x128xf32>
      %c0_25 = arith.constant 0 : index
      %c0_26 = arith.constant 0 : index
      %35 = vector.load %arg11[%c0_25, %c0_26] : memref<8x128xf32, #tpu.memory_space<vmem>>, vector<8x128xf32>
      tpu.vector_store %arg11[%c0_25, %c0_26], %34 {strides = array<i32>} : memref<8x128xf32, #tpu.memory_space<vmem>>, vector<8x128xf32>,
      %cst_27 = arith.constant 0.000000e+00 : f32
      %36 = vector.broadcast %cst_27 : f32 to vector<8x128xf32>
      %c0_28 = arith.constant 0 : index
      %c0_29 = arith.constant 0 : index
      %37 = vector.load %arg12[%c0_28, %c0_29] : memref<8x128xf32, #tpu.memory_space<vmem>>, vector<8x128xf32>
      tpu.vector_store %arg12[%c0_28, %c0_29], %36 {strides = array<i32>} : memref<8x128xf32, #tpu.memory_space<vmem>>, vector<8x128xf32>,
    } else {
    }
    %c0 = arith.constant 0 : index
    %c0_1 = arith.constant 0 : index
    %3 = vector.load %arg4[%c0, %c0_1] : memref<128x128xf32, #tpu.memory_space<vmem>>, vector<128x128xf32>
    %c0_2 = arith.constant 0 : index
    %c0_3 = arith.constant 0 : index
    %4 = vector.load %arg5[%c0_2, %c0_3] : memref<128x128xf32, #tpu.memory_space<vmem>>, vector<128x128xf32>
    %c0_4 = arith.constant 0 : index
    %c0_5 = arith.constant 0 : index
    %5 = vector.load %arg6[%c0_4, %c0_5] : memref<128x128xf32, #tpu.memory_space<vmem>>, vector<128x128xf32>
    %cst = arith.constant 0.000000e+00 : f32
    %6 = vector.broadcast %cst : f32 to vector<128x128xf32>
    %7 = arith.maximumf %4, %6 : vector<128x128xf32>
    %8 = math.absf %4 : vector<128x128xf32>
    %cst_6 = arith.constant 0.000000e+00 : f32
    %9 = vector.broadcast %cst_6 : f32 to vector<128x128xf32>
    %10 = arith.subf %9, %8 : vector<128x128xf32>
    %11 = math.exp %10 : vector<128x128xf32>
    %12 = math.log1p %11 : vector<128x128xf32>
    %13 = arith.addf %7, %12 : vector<128x128xf32>
    %14 = arith.mulf %13, %5 : vector<128x128xf32>
    %15 = arith.addf %3, %14 : vector<128x128xf32>
    %c0_7 = arith.constant 0 : index
    %c0_8 = arith.constant 0 : index
    %16 = vector.load %arg13[%c0_7, %c0_8] : memref<8x128xf32, #tpu.memory_space<vmem>>, vector<8x128xf32>
    %c0_9 = arith.constant 0 : index
    %c0_10 = arith.constant 0 : index
    %17 = vector.load %arg3[%c0_9, %c0_10] : memref<8x128xf32, #tpu.memory_space<vmem>>, vector<8x128xf32>
    %cst_11 = arith.constant dense<0.000000e+00> : vector<8x128xf32>
    %18 = tpu.matmul %17, %15, %cst_11 {dimension_numbers = #tpu.dot_dimension_numbers<[1], [1], [0], [0], [0, 0, 1, 0], [], []>} : vector<8x128xf32>, vector<128x128xf32>, vector<8x128xf32> -> vector<8x128xf32>
    %19 = arith.addf %16, %18 : vector<8x128xf32>
    %c0_12 = arith.constant 0 : index
    %c0_13 = arith.constant 0 : index
    %20 = vector.load %arg13[%c0_12, %c0_13] : memref<8x128xf32, #tpu.memory_space<vmem>>, vector<8x128xf32>
    tpu.vector_store %arg13[%c0_12, %c0_13], %19 {strides = array<i32>} : memref<8x128xf32, #tpu.memory_space<vmem>>, vector<8x128xf32>,
    %c0_i32_14 = arith.constant 0 : i32
    %21 = arith.cmpi eq, %arg0, %c0_i32_14 : i32
    %22 = arith.extui %21 : i1 to i32
    %c0_i32_15 = arith.constant 0 : i32
    %23 = arith.cmpi ne, %22, %c0_i32_15 : i32
    scf.if %23 {
      %32 = tpu.iota {dimensions = array<i32: 0>} : vector<128x128xi32>
      %c128_i32 = arith.constant 128 : i32
      %33 = arith.muli %arg1, %c128_i32 : i32
      %34 = vector.broadcast %33 : i32 to vector<128x128xi32>
      %35 = arith.addi %32, %34 : vector<128x128xi32>
      %36 = tpu.iota {dimensions = array<i32: 1>} : vector<128x128xi32>
      %c128_i32_21 = arith.constant 128 : i32
      %37 = arith.muli %arg2, %c128_i32_21 : i32
      %38 = vector.broadcast %37 : i32 to vector<128x128xi32>
      %39 = arith.addi %36, %38 : vector<128x128xi32>
      %c16_i32 = arith.constant 16 : i32
      %40 = vector.broadcast %c16_i32 : i32 to vector<128x128xi32>
      %41 = arith.cmpi slt, %35, %40 : vector<128x128xi32>
      %c32_i32 = arith.constant 32 : i32
      %42 = vector.broadcast %c32_i32 : i32 to vector<128x128xi32>
      %43 = arith.cmpi slt, %39, %42 : vector<128x128xi32>
      %44 = arith.andi %41, %43 : vector<128x128xi1>
      %45 = math.log %13 : vector<128x128xf32>
      %cst_22 = arith.constant -0.918938517 : f32
      %46 = vector.broadcast %cst_22 : f32 to vector<128x128xf32>
      %47 = arith.subf %46, %45 : vector<128x128xf32>
      %cst_23 = arith.constant 5.000000e-01 : f32
      %48 = vector.broadcast %cst_23 : f32 to vector<128x128xf32>
      %49 = arith.mulf %48, %5 : vector<128x128xf32>
      %50 = arith.mulf %49, %5 : vector<128x128xf32>
      %51 = arith.subf %47, %50 : vector<128x128xf32>
      %cst_24 = arith.constant 1.000000e+00 : f32
      %52 = vector.broadcast %cst_24 : f32 to vector<128x128xf32>
      %53 = arith.mulf %15, %52 : vector<128x128xf32>
      %54 = arith.mulf %53, %53 : vector<128x128xf32>
      %cst_25 = arith.constant 5.000000e-01 : f32
      %55 = vector.broadcast %cst_25 : f32 to vector<128x128xf32>
      %56 = arith.mulf %55, %54 : vector<128x128xf32>
      %cst_26 = arith.constant -1.6120857 : f32
      %57 = vector.broadcast %cst_26 : f32 to vector<128x128xf32>
      %58 = arith.subf %57, %56 : vector<128x128xf32>
      %cst_27 = arith.constant 403.428802 : f32
      %59 = vector.broadcast %cst_27 : f32 to vector<128x128xf32>
      %60 = arith.mulf %15, %59 : vector<128x128xf32>
      %61 = arith.mulf %60, %60 : vector<128x128xf32>
      %cst_28 = arith.constant 5.000000e-01 : f32
      %62 = vector.broadcast %cst_28 : f32 to vector<128x128xf32>
      %63 = arith.mulf %62, %61 : vector<128x128xf32>
      %cst_29 = arith.constant 4.38791418 : f32
      %64 = vector.broadcast %cst_29 : f32 to vector<128x128xf32>
      %65 = arith.subf %64, %63 : vector<128x128xf32>
      %66 = arith.maximumf %58, %65 : vector<128x128xf32>
      %67 = arith.subf %58, %65 : vector<128x128xf32>
      %68 = math.absf %67 : vector<128x128xf32>
      %cst_30 = arith.constant 0.000000e+00 : f32
      %69 = vector.broadcast %cst_30 : f32 to vector<128x128xf32>
      %70 = arith.subf %69, %68 : vector<128x128xf32>
      %71 = math.exp %70 : vector<128x128xf32>
      %72 = math.log1p %71 : vector<128x128xf32>
      %73 = arith.addf %66, %72 : vector<128x128xf32>
      %c0_31 = arith.constant 0 : index
      %c0_32 = arith.constant 0 : index
      %74 = vector.load %arg11[%c0_31, %c0_32] : memref<8x128xf32, #tpu.memory_space<vmem>>, vector<8x128xf32>
      %cst_33 = arith.constant 0.000000e+00 : f32
      %75 = vector.broadcast %cst_33 : f32 to vector<128x128xf32>
      %76 = arith.select %44, %73, %75 : vector<128x128xi1>, vector<128x128xf32>
      %77 = vector.shape_cast %76 : vector<128x128xf32> to vector<1x128x128xf32>
      %cst_34 = arith.constant dense<0.000000e+00> : vector<1xf32>
      %78 = vector.multi_reduction <add>, %77, %cst_34 [1, 2] : vector<1x128x128xf32> to vector<1xf32>
      %79 = vector.shape_cast %78 : vector<1xf32> to vector<1x1x1xf32>
      %80 = vector.extract %79[0, 0, 0] : f32 from vector<1x1x1xf32>
      %81 = vector.broadcast %80 : f32 to vector<8x128xf32>
      %82 = arith.addf %74, %81 : vector<8x128xf32>
      %c0_35 = arith.constant 0 : index
      %c0_36 = arith.constant 0 : index
      %83 = vector.load %arg11[%c0_35, %c0_36] : memref<8x128xf32, #tpu.memory_space<vmem>>, vector<8x128xf32>
      tpu.vector_store %arg11[%c0_35, %c0_36], %82 {strides = array<i32>} : memref<8x128xf32, #tpu.memory_space<vmem>>, vector<8x128xf32>,
      %c0_37 = arith.constant 0 : index
      %c0_38 = arith.constant 0 : index
      %84 = vector.load %arg12[%c0_37, %c0_38] : memref<8x128xf32, #tpu.memory_space<vmem>>, vector<8x128xf32>
      %cst_39 = arith.constant 0.000000e+00 : f32
      %85 = vector.broadcast %cst_39 : f32 to vector<128x128xf32>
      %86 = arith.select %44, %51, %85 : vector<128x128xi1>, vector<128x128xf32>
      %87 = vector.shape_cast %86 : vector<128x128xf32> to vector<1x128x128xf32>
      %cst_40 = arith.constant dense<0.000000e+00> : vector<1xf32>
      %88 = vector.multi_reduction <add>, %87, %cst_40 [1, 2] : vector<1x128x128xf32> to vector<1xf32>
      %89 = vector.shape_cast %88 : vector<1xf32> to vector<1x1x1xf32>
      %90 = vector.extract %89[0, 0, 0] : f32 from vector<1x1x1xf32>
      %91 = vector.broadcast %90 : f32 to vector<8x128xf32>
      %92 = arith.addf %84, %91 : vector<8x128xf32>
      %c0_41 = arith.constant 0 : index
      %c0_42 = arith.constant 0 : index
      %93 = vector.load %arg12[%c0_41, %c0_42] : memref<8x128xf32, #tpu.memory_space<vmem>>, vector<8x128xf32>
      tpu.vector_store %arg12[%c0_41, %c0_42], %92 {strides = array<i32>} : memref<8x128xf32, #tpu.memory_space<vmem>>, vector<8x128xf32>,
    } else {
    }
    %c0_i32_16 = arith.constant 0 : i32
    %24 = arith.cmpi eq, %arg0, %c0_i32_16 : i32
    %c0_i32_17 = arith.constant 0 : i32
    %25 = arith.cmpi eq, %arg2, %c0_i32_17 : i32
    %26 = arith.andi %24, %25 : i1
    %27 = arith.extui %26 : i1 to i32
    %c0_i32_18 = arith.constant 0 : i32
    %28 = arith.cmpi ne, %27, %c0_i32_18 : i32
    scf.if %28 {
      %c0_21 = arith.constant 0 : index
      %c0_22 = arith.constant 0 : index
      %32 = vector.load %arg7[%c0_21, %c0_22] : memref<1x128xf32, #tpu.memory_space<vmem>>, vector<1x128xf32>
      %c0_23 = arith.constant 0 : index
      %c0_24 = arith.constant 0 : index
      %33 = vector.load %arg8[%c0_23, %c0_24] : memref<1x128xf32, #tpu.memory_space<vmem>>, vector<1x128xf32>
      %c0_25 = arith.constant 0 : index
      %c0_26 = arith.constant 0 : index
      %34 = vector.load %arg9[%c0_25, %c0_26] : memref<1x128xf32, #tpu.memory_space<vmem>>, vector<1x128xf32>
      %cst_27 = arith.constant 0.000000e+00 : f32
      %35 = vector.broadcast %cst_27 : f32 to vector<1x128xf32>
      %36 = arith.maximumf %33, %35 : vector<1x128xf32>
      %37 = math.absf %33 : vector<1x128xf32>
      %cst_28 = arith.constant 0.000000e+00 : f32
      %38 = vector.broadcast %cst_28 : f32 to vector<1x128xf32>
      %39 = arith.subf %38, %37 : vector<1x128xf32>
      %40 = math.exp %39 : vector<1x128xf32>
      %41 = math.log1p %40 : vector<1x128xf32>
      %42 = arith.addf %36, %41 : vector<1x128xf32>
      %43 = arith.mulf %42, %34 : vector<1x128xf32>
      %44 = arith.addf %32, %43 : vector<1x128xf32>
      %45 = tpu.iota {dimensions = array<i32: 1>} : vector<1x128xi32>
      %c128_i32 = arith.constant 128 : i32
      %46 = arith.muli %arg1, %c128_i32 : i32
      %47 = vector.broadcast %46 : i32 to vector<1x128xi32>
      %48 = arith.addi %45, %47 : vector<1x128xi32>
      %c16_i32 = arith.constant 16 : i32
      %49 = vector.broadcast %c16_i32 : i32 to vector<1x128xi32>
      %50 = arith.cmpi slt, %48, %49 : vector<1x128xi32>
      %51 = math.log %42 : vector<1x128xf32>
      %cst_29 = arith.constant -0.918938517 : f32
      %52 = vector.broadcast %cst_29 : f32 to vector<1x128xf32>
      %53 = arith.subf %52, %51 : vector<1x128xf32>
      %cst_30 = arith.constant 5.000000e-01 : f32
      %54 = vector.broadcast %cst_30 : f32 to vector<1x128xf32>
      %55 = arith.mulf %54, %34 : vector<1x128xf32>
      %56 = arith.mulf %55, %34 : vector<1x128xf32>
      %57 = arith.subf %53, %56 : vector<1x128xf32>
      %cst_31 = arith.constant 1.000000e+00 : f32
      %58 = vector.broadcast %cst_31 : f32 to vector<1x128xf32>
      %59 = arith.mulf %44, %58 : vector<1x128xf32>
      %60 = arith.mulf %59, %59 : vector<1x128xf32>
      %cst_32 = arith.constant 5.000000e-01 : f32
      %61 = vector.broadcast %cst_32 : f32 to vector<1x128xf32>
      %62 = arith.mulf %61, %60 : vector<1x128xf32>
      %cst_33 = arith.constant -1.6120857 : f32
      %63 = vector.broadcast %cst_33 : f32 to vector<1x128xf32>
      %64 = arith.subf %63, %62 : vector<1x128xf32>
      %cst_34 = arith.constant 403.428802 : f32
      %65 = vector.broadcast %cst_34 : f32 to vector<1x128xf32>
      %66 = arith.mulf %44, %65 : vector<1x128xf32>
      %67 = arith.mulf %66, %66 : vector<1x128xf32>
      %cst_35 = arith.constant 5.000000e-01 : f32
      %68 = vector.broadcast %cst_35 : f32 to vector<1x128xf32>
      %69 = arith.mulf %68, %67 : vector<1x128xf32>
      %cst_36 = arith.constant 4.38791418 : f32
      %70 = vector.broadcast %cst_36 : f32 to vector<1x128xf32>
      %71 = arith.subf %70, %69 : vector<1x128xf32>
      %72 = arith.maximumf %64, %71 : vector<1x128xf32>
      %73 = arith.subf %64, %71 : vector<1x128xf32>
      %74 = math.absf %73 : vector<1x128xf32>
      %cst_37 = arith.constant 0.000000e+00 : f32
      %75 = vector.broadcast %cst_37 : f32 to vector<1x128xf32>
      %76 = arith.subf %75, %74 : vector<1x128xf32>
      %77 = math.exp %76 : vector<1x128xf32>
      %78 = math.log1p %77 : vector<1x128xf32>
      %79 = arith.addf %72, %78 : vector<1x128xf32>
      %c0_38 = arith.constant 0 : index
      %c0_39 = arith.constant 0 : index
      %80 = vector.load %arg11[%c0_38, %c0_39] : memref<8x128xf32, #tpu.memory_space<vmem>>, vector<8x128xf32>
      %cst_40 = arith.constant 0.000000e+00 : f32
      %81 = vector.broadcast %cst_40 : f32 to vector<1x128xf32>
      %82 = arith.select %50, %79, %81 : vector<1x128xi1>, vector<1x128xf32>
      %83 = vector.shape_cast %82 : vector<1x128xf32> to vector<1x1x128xf32>
      %cst_41 = arith.constant dense<0.000000e+00> : vector<1xf32>
      %84 = vector.multi_reduction <add>, %83, %cst_41 [1, 2] : vector<1x1x128xf32> to vector<1xf32>
      %85 = vector.shape_cast %84 : vector<1xf32> to vector<1x1x1xf32>
      %86 = vector.extract %85[0, 0, 0] : f32 from vector<1x1x1xf32>
      %87 = vector.broadcast %86 : f32 to vector<8x128xf32>
      %88 = arith.addf %80, %87 : vector<8x128xf32>
      %c0_42 = arith.constant 0 : index
      %c0_43 = arith.constant 0 : index
      %89 = vector.load %arg11[%c0_42, %c0_43] : memref<8x128xf32, #tpu.memory_space<vmem>>, vector<8x128xf32>
      tpu.vector_store %arg11[%c0_42, %c0_43], %88 {strides = array<i32>} : memref<8x128xf32, #tpu.memory_space<vmem>>, vector<8x128xf32>,
      %c0_44 = arith.constant 0 : index
      %c0_45 = arith.constant 0 : index
      %90 = vector.load %arg12[%c0_44, %c0_45] : memref<8x128xf32, #tpu.memory_space<vmem>>, vector<8x128xf32>
      %cst_46 = arith.constant 0.000000e+00 : f32
      %91 = vector.broadcast %cst_46 : f32 to vector<1x128xf32>
      %92 = arith.select %50, %57, %91 : vector<1x128xi1>, vector<1x128xf32>
      %93 = vector.shape_cast %92 : vector<1x128xf32> to vector<1x1x128xf32>
      %cst_47 = arith.constant dense<0.000000e+00> : vector<1xf32>
      %94 = vector.multi_reduction <add>, %93, %cst_47 [1, 2] : vector<1x1x128xf32> to vector<1xf32>
      %95 = vector.shape_cast %94 : vector<1xf32> to vector<1x1x1xf32>
      %96 = vector.extract %95[0, 0, 0] : f32 from vector<1x1x1xf32>
      %97 = vector.broadcast %96 : f32 to vector<8x128xf32>
      %98 = arith.addf %90, %97 : vector<8x128xf32>
      %c0_48 = arith.constant 0 : index
      %c0_49 = arith.constant 0 : index
      %99 = vector.load %arg12[%c0_48, %c0_49] : memref<8x128xf32, #tpu.memory_space<vmem>>, vector<8x128xf32>
      tpu.vector_store %arg12[%c0_48, %c0_49], %98 {strides = array<i32>} : memref<8x128xf32, #tpu.memory_space<vmem>>, vector<8x128xf32>,
    } else {
    }
    %c0_i32_19 = arith.constant 0 : i32
    %29 = arith.cmpi eq, %arg2, %c0_i32_19 : i32
    %30 = arith.extui %29 : i1 to i32
    %c0_i32_20 = arith.constant 0 : i32
    %31 = arith.cmpi ne, %30, %c0_i32_20 : i32
    scf.if %31 {
      %c0_21 = arith.constant 0 : index
      %c0_22 = arith.constant 0 : index
      %32 = vector.load %arg7[%c0_21, %c0_22] : memref<1x128xf32, #tpu.memory_space<vmem>>, vector<1x128xf32>
      %c0_23 = arith.constant 0 : index
      %c0_24 = arith.constant 0 : index
      %33 = vector.load %arg8[%c0_23, %c0_24] : memref<1x128xf32, #tpu.memory_space<vmem>>, vector<1x128xf32>
      %cst_25 = arith.constant 0.000000e+00 : f32
      %34 = vector.broadcast %cst_25 : f32 to vector<1x128xf32>
      %35 = arith.maximumf %33, %34 : vector<1x128xf32>
      %36 = math.absf %33 : vector<1x128xf32>
      %cst_26 = arith.constant 0.000000e+00 : f32
      %37 = vector.broadcast %cst_26 : f32 to vector<1x128xf32>
      %38 = arith.subf %37, %36 : vector<1x128xf32>
      %39 = math.exp %38 : vector<1x128xf32>
      %40 = math.log1p %39 : vector<1x128xf32>
      %41 = arith.addf %35, %40 : vector<1x128xf32>
      %c0_27 = arith.constant 0 : index
      %c0_28 = arith.constant 0 : index
      %42 = vector.load %arg9[%c0_27, %c0_28] : memref<1x128xf32, #tpu.memory_space<vmem>>, vector<1x128xf32>
      %43 = arith.mulf %41, %42 : vector<1x128xf32>
      %44 = arith.addf %32, %43 : vector<1x128xf32>
      %c0_29 = arith.constant 0 : index
      %c0_30 = arith.constant 0 : index
      %45 = vector.load %arg13[%c0_29, %c0_30] : memref<8x128xf32, #tpu.memory_space<vmem>>, vector<8x128xf32>
      %46 = vector.broadcast %44 : vector<1x128xf32> to vector<8x128xf32>
      %47 = arith.addf %45, %46 : vector<8x128xf32>
      %c0_31 = arith.constant 0 : index
      %c0_32 = arith.constant 0 : index
      %48 = vector.load %arg10[%c0_31, %c0_32] : memref<8x128xf32, #tpu.memory_space<vmem>>, vector<8x128xf32>
      tpu.vector_store %arg10[%c0_31, %c0_32], %47 {strides = array<i32>} : memref<8x128xf32, #tpu.memory_space<vmem>>, vector<8x128xf32>,
    } else {
    }
    return
  }
  func.func @transform_0(%arg0: i32, %arg1: i32, %arg2: i32) -> (i32, i32) {
    %c0_i32 = arith.constant 0 : i32
    return %arg0, %arg2 : i32, i32
  }
  func.func @transform_1(%arg0: i32, %arg1: i32, %arg2: i32) -> (i32, i32) {
    %c0_i32 = arith.constant 0 : i32
    return %arg1, %arg2 : i32, i32
  }
  func.func @transform_2(%arg0: i32, %arg1: i32, %arg2: i32) -> (i32, i32) {
    %c0_i32 = arith.constant 0 : i32
    return %arg1, %arg2 : i32, i32
  }
  func.func @transform_3(%arg0: i32, %arg1: i32, %arg2: i32) -> (i32, i32) {
    %c0_i32 = arith.constant 0 : i32
    return %arg1, %arg2 : i32, i32
  }
  func.func @transform_4(%arg0: i32, %arg1: i32, %arg2: i32) -> (i32, i32) {
    %c0_i32 = arith.constant 0 : i32
    %c0_i32_0 = arith.constant 0 : i32
    return %c0_i32, %arg1 : i32, i32
  }
  func.func @transform_5(%arg0: i32, %arg1: i32, %arg2: i32) -> (i32, i32) {
    %c0_i32 = arith.constant 0 : i32
    %c0_i32_0 = arith.constant 0 : i32
    return %c0_i32, %arg1 : i32, i32
  }
  func.func @transform_6(%arg0: i32, %arg1: i32, %arg2: i32) -> (i32, i32) {
    %c0_i32 = arith.constant 0 : i32
    %c0_i32_0 = arith.constant 0 : i32
    return %c0_i32, %arg1 : i32, i32
  }
  func.func @transform_7(%arg0: i32, %arg1: i32, %arg2: i32) -> (i32, i32) {
    %c0_i32 = arith.constant 0 : i32
    return %arg0, %arg1 : i32, i32
  }
  func.func @transform_8(%arg0: i32, %arg1: i32, %arg2: i32) -> (i32, i32) {
    %c0_i32 = arith.constant 0 : i32
    return %arg0, %arg1 : i32, i32
  }
  func.func @transform_9(%arg0: i32, %arg1: i32, %arg2: i32) -> (i32, i32) {
    %c0_i32 = arith.constant 0 : i32
    return %arg0, %arg1 : i32, i32
  }
}

</mosaic_0001>

<llo_original>
// kernel: tpu_custom_call.1
$region0: #{tpu_custom_call.1}
  #allocation0 [shape = 'u32[]', space=smem, size = 0x4, offset = 0x4, fixed_abs, tag = 'smem constant byte address 0x4 - core index']
  #allocation1 [shape = 'u32[144,128]{1,0:T(1,128)}', space=vmem, size = 0x12000, scoped, tag = 'internal scratch']
  #allocation2 [shape = 'f32[8,128]{1,0:T(8,128)}', space=vmem, size = 0x1000, scoped, tag = 'scratch operand']
  %s0 = inlined_call_operand.hbm [shape: f32[8,128], index: 0, kind: input, shape index: {}]
  %s1 = inlined_call_operand.hbm [shape: f32[128,128], index: 1, kind: input, shape index: {}]
  %s2 = inlined_call_operand.hbm [shape: f32[128,128], index: 2, kind: input, shape index: {}]
  %s3 = inlined_call_operand.hbm [shape: f32[128,128], index: 3, kind: input, shape index: {}]
  %s4 = inlined_call_operand.vmem [shape: f32[1,128], index: 4, kind: input, shape index: {}]
  %s5 = inlined_call_operand.vmem [shape: f32[1,128], index: 5, kind: input, shape index: {}]
  %s6 = inlined_call_operand.vmem [shape: f32[1,128], index: 6, kind: input, shape index: {}]
  %s7 = inlined_call_operand.hbm [shape: f32[8,128], index: 7, kind: output, shape index: {0}]
  %s8 = inlined_call_operand.hbm [shape: f32[8,128], index: 8, kind: output, shape index: {1}]
  %s9 = inlined_call_operand.hbm [shape: f32[8,128], index: 9, kind: output, shape index: {2}]
  %10 = xla_tuple %s7, %s8, %s9
  %s11 = sld [smem:[#allocation0]]
  $region86: #{tpu_custom_call.1} parent=0
    _
  %s13 = ssub.s32 1, %s11
  %s14 = scalar_select 0, %s13, %s11
  $region1: #{tpu_custom_call.1} parent=0
    #allocation3 [shape = 'u8[4096]{0}', space=vmem, size = 0x1000, scoped, tag = 'input window, operand 0, single buffered']
    #allocation4 [shape = 's32[1]{0}', space=sflag, size = 0x4, scoped, tag = 'scoped memory for tpu_custom_call.1']
    #allocation5 [shape = 's32[1]{0}', space=sflag, size = 0x4, scoped, tag = 'scoped memory for tpu_custom_call.1']
    #allocation6 [shape = 'u8[65536]{0}', space=vmem, size = 0x10000, scoped, tag = 'input window, operand 1, single buffered']
    #allocation7 [shape = 's32[1]{0}', space=sflag, size = 0x4, scoped, tag = 'scoped memory for tpu_custom_call.1']
    #allocation8 [shape = 'u8[65536]{0}', space=vmem, size = 0x10000, scoped, tag = 'input window, operand 2, single buffered']
    #allocation9 [shape = 'u8[65536]{0}', space=vmem, size = 0x10000, scoped, tag = 'input window, operand 3, single buffered']
    #allocation10 [shape = 's32[1]{0}', space=sflag, size = 0x4, scoped, tag = 'scoped memory for tpu_custom_call.1']
    #allocation11 [shape = 'u8[4096]{0}', space=vmem, size = 0x1000, scoped, tag = 'output window, operand 0, single buffered']
    #allocation12 [shape = 'u8[4096]{0}', space=vmem, size = 0x1000, scoped, tag = 'output window, operand 1, single buffered']
    #allocation13 [shape = 's32[1]{0}', space=sflag, size = 0x4, scoped, tag = 'scoped memory for tpu_custom_call.1']
    #allocation14 [shape = 'u8[4096]{0}', space=vmem, size = 0x1000, scoped, tag = 'output window, operand 2, single buffered']
    %15 = vsyncpa [#allocation4], 0
    %16 = vsyncpa [#allocation7], 0
    %17 = vsyncpa [#allocation10], 0
    %18 = vsyncpa [#allocation5], 0
    %19 = vsyncpa [#allocation13], 0
    // Predicated region
    $region2: #{tpu_custom_call.1} parent=1 // pred_check
      _
    $region3: #{tpu_custom_call.1} parent=1 // pred_check_branch
      %21 = sbr.rel (0) target = $region5
    $region4: #{tpu_custom_call.1} parent=1 // pred_region
      %s23 = ssub.s32 128, 128
      %24 = vsyncadd [#allocation4], %s23
      %s26 = sshll.u32 [#allocation3], 4
      %s27 = int_to_ptr.vmem [resolvable:$true] %s26
      %29 = dma.hbm_to_vmem [thread:$0]  %s0, 128, %s27, [#allocation4]
    $region5: #{tpu_custom_call.1} parent=1 // pred_fallthru
      _
    // Predicated region
    $region6: #{tpu_custom_call.1} parent=1 // pred_check
      _
    $region7: #{tpu_custom_call.1} parent=1 // pred_check_branch
      %31 = sbr.rel (0) target = $region9
    $region8: #{tpu_custom_call.1} parent=1 // pred_region
      %s33 = ssub.s32 2048, 2048
      %34 = vsyncadd [#allocation7], %s33
      %s35 = sshll.u32 [#allocation6], 4
      %s36 = int_to_ptr.vmem [resolvable:$true] %s35
      %41 = dma.hbm_to_vmem [thread:$0]  %s1, 2048, %s36, [#allocation7], 128, 128, 8
    $region9: #{tpu_custom_call.1} parent=1 // pred_fallthru
      _
    // Predicated region
    $region10: #{tpu_custom_call.1} parent=1 // pred_check
      _
    $region11: #{tpu_custom_call.1} parent=1 // pred_check_branch
      %43 = sbr.rel (0) target = $region13
    $region12: #{tpu_custom_call.1} parent=1 // pred_region
      %s45 = ssub.s32 2048, 2048
      %46 = vsyncadd [#allocation7], %s45
      %s47 = sshll.u32 [#allocation8], 4
      %s48 = int_to_ptr.vmem [resolvable:$true] %s47
      %53 = dma.hbm_to_vmem [thread:$0]  %s2, 2048, %s48, [#allocation7], 128, 128, 8
    $region13: #{tpu_custom_call.1} parent=1 // pred_fallthru
      _
    // Predicated region
    $region14: #{tpu_custom_call.1} parent=1 // pred_check
      _
    $region15: #{tpu_custom_call.1} parent=1 // pred_check_branch
      %55 = sbr.rel (0) target = $region17
    $region16: #{tpu_custom_call.1} parent=1 // pred_region
      %s57 = ssub.s32 2048, 2048
      %58 = vsyncadd [#allocation10], %s57
      %s59 = sshll.u32 [#allocation9], 4
      %s60 = int_to_ptr.vmem [resolvable:$true] %s59
      %65 = dma.hbm_to_vmem [thread:$0]  %s3, 2048, %s60, [#allocation10], 128, 128, 8
    $region17: #{tpu_custom_call.1} parent=1 // pred_fallthru
      _
    // Predicated region
    $region18: #{tpu_custom_call.1} parent=1 // pred_check
      _
    $region19: #{tpu_custom_call.1} parent=1 // pred_check_branch
      %67 = sbr.rel (0) target = $region21
    $region20: #{tpu_custom_call.1} parent=1 // pred_region
      _
    $region21: #{tpu_custom_call.1} parent=1 // pred_fallthru
      _
    // Predicated region
    $region22: #{tpu_custom_call.1} parent=1 // pred_check
      _
    $region23: #{tpu_custom_call.1} parent=1 // pred_check_branch
      %69 = sbr.rel (0) target = $region25
    $region24: #{tpu_custom_call.1} parent=1 // pred_region
      _
    $region25: #{tpu_custom_call.1} parent=1 // pred_fallthru
      _
    // Predicated region
    $region26: #{tpu_custom_call.1} parent=1 // pred_check
      _
    $region27: #{tpu_custom_call.1} parent=1 // pred_check_branch
      %71 = sbr.rel (0) target = $region29
    $region28: #{tpu_custom_call.1} parent=1 // pred_region
      _
    $region29: #{tpu_custom_call.1} parent=1 // pred_fallthru
      _
    // Predicated region
    $region30: #{tpu_custom_call.1} parent=1 // pred_check
      _
    $region31: #{tpu_custom_call.1} parent=1 // pred_check_branch
      %73 = sbr.rel (0) target = $region33
    $region32: #{tpu_custom_call.1} parent=1 // pred_region
      %74 = dma.done [#allocation4], 128
    $region33: #{tpu_custom_call.1} parent=1 // pred_fallthru
      _
    // Predicated region
    $region34: #{tpu_custom_call.1} parent=1 // pred_check
      _
    $region35: #{tpu_custom_call.1} parent=1 // pred_check_branch
      %76 = sbr.rel (0) target = $region37
    $region36: #{tpu_custom_call.1} parent=1 // pred_region
      %77 = dma.done [#allocation7], 2048
    $region37: #{tpu_custom_call.1} parent=1 // pred_fallthru
      _
    // Predicated region
    $region38: #{tpu_custom_call.1} parent=1 // pred_check
      _
    $region39: #{tpu_custom_call.1} parent=1 // pred_check_branch
      %79 = sbr.rel (0) target = $region41
    $region40: #{tpu_custom_call.1} parent=1 // pred_region
      %80 = dma.done [#allocation7], 2048
    $region41: #{tpu_custom_call.1} parent=1 // pred_fallthru
      _
    // Predicated region
    $region42: #{tpu_custom_call.1} parent=1 // pred_check
      _
    $region43: #{tpu_custom_call.1} parent=1 // pred_check_branch
      %82 = sbr.rel (0) target = $region45
    $region44: #{tpu_custom_call.1} parent=1 // pred_region
      %83 = dma.done [#allocation10], 2048
    $region45: #{tpu_custom_call.1} parent=1 // pred_fallthru
      _
    %p84 = scmp.eq.s32.totalorder 0, 0
    // Predicated region
    $region46: #{tpu_custom_call.1} parent=1 // pred_check
      %p85 = pneg %p84
    $region47: #{tpu_custom_call.1} parent=1 // pred_check_branch
      %87 = sbr.rel (%p85) target = $region49
    $region48: #{tpu_custom_call.1} parent=1 // pred_region
      %88 = vst [vmem:[#allocation2] sm:$0xff] 0.0
      %89 = vst [vmem:[#allocation12] sm:$0xff] 0.0
      %90 = vst [vmem:[#allocation14] sm:$0xff] 0.0
    $region49: #{tpu_custom_call.1} parent=1 // pred_fallthru
      _
    %v91 = vld [vmem:[#allocation6] sm:$0xff]
    %v92 = vld [vmem:[#allocation6 + $0x8] sm:$0xff]
    %v93 = vld [vmem:[#allocation6 + $0x10] sm:$0xff]
    %v94 = vld [vmem:[#allocation6 + $0x18] sm:$0xff]
    %v95 = vld [vmem:[#allocation6 + $0x20] sm:$0xff]
    %v96 = vld [vmem:[#allocation6 + $0x28] sm:$0xff]
    %v97 = vld [vmem:[#allocation6 + $0x30] sm:$0xff]
    %v98 = vld [vmem:[#allocation6 + $0x38] sm:$0xff]
    %v99 = vld [vmem:[#allocation6 + $0x40] sm:$0xff]
    %v100 = vld [vmem:[#allocation6 + $0x48] sm:$0xff]
    %v101 = vld [vmem:[#allocation6 + $0x50] sm:$0xff]
    %v102 = vld [vmem:[#allocation6 + $0x58] sm:$0xff]
    %v103 = vld [vmem:[#allocation6 + $0x60] sm:$0xff]
    %v104 = vld [vmem:[#allocation6 + $0x68] sm:$0xff]
    %v105 = vld [vmem:[#allocation6 + $0x70] sm:$0xff]
    %v106 = vld [vmem:[#allocation6 + $0x78] sm:$0xff]
    %v107 = vld [vmem:[#allocation8] sm:$0xff]
    %v108 = vld [vmem:[#allocation8 + $0x8] sm:$0xff]
    %v109 = vld [vmem:[#allocation8 + $0x10] sm:$0xff]
    %v110 = vld [vmem:[#allocation8 + $0x18] sm:$0xff]
    %v111 = vld [vmem:[#allocation8 + $0x20] sm:$0xff]
    %v112 = vld [vmem:[#allocation8 + $0x28] sm:$0xff]
    %v113 = vld [vmem:[#allocation8 + $0x30] sm:$0xff]
    %v114 = vld [vmem:[#allocation8 + $0x38] sm:$0xff]
    %v115 = vld [vmem:[#allocation8 + $0x40] sm:$0xff]
    %v116 = vld [vmem:[#allocation8 + $0x48] sm:$0xff]
    %v117 = vld [vmem:[#allocation8 + $0x50] sm:$0xff]
    %v118 = vld [vmem:[#allocation8 + $0x58] sm:$0xff]
    %v119 = vld [vmem:[#allocation8 + $0x60] sm:$0xff]
    %v120 = vld [vmem:[#allocation8 + $0x68] sm:$0xff]
    %v121 = vld [vmem:[#allocation8 + $0x70] sm:$0xff]
    %v122 = vld [vmem:[#allocation8 + $0x78] sm:$0xff]
    %v123 = vld [vmem:[#allocation9] sm:$0xff]
    %v124 = vld [vmem:[#allocation9 + $0x8] sm:$0xff]
    %v125 = vld [vmem:[#allocation9 + $0x10] sm:$0xff]
    %v126 = vld [vmem:[#allocation9 + $0x18] sm:$0xff]
    %v127 = vld [vmem:[#allocation9 + $0x20] sm:$0xff]
    %v128 = vld [vmem:[#allocation9 + $0x28] sm:$0xff]
    %v129 = vld [vmem:[#allocation9 + $0x30] sm:$0xff]
    %v130 = vld [vmem:[#allocation9 + $0x38] sm:$0xff]
    %v131 = vld [vmem:[#allocation9 + $0x40] sm:$0xff]
    %v132 = vld [vmem:[#allocation9 + $0x48] sm:$0xff]
    %v133 = vld [vmem:[#allocation9 + $0x50] sm:$0xff]
    %v134 = vld [vmem:[#allocation9 + $0x58] sm:$0xff]
    %v135 = vld [vmem:[#allocation9 + $0x60] sm:$0xff]
    %v136 = vld [vmem:[#allocation9 + $0x68] sm:$0xff]
    %v137 = vld [vmem:[#allocation9 + $0x70] sm:$0xff]
    %v138 = vld [vmem:[#allocation9 + $0x78] sm:$0xff]
    %v139 = vmax.f32 %v107, 0.0
    %v140 = vmax.f32 %v108, 0.0
    %v141 = vmax.f32 %v109, 0.0
    %v142 = vmax.f32 %v110, 0.0
    %v143 = vmax.f32 %v111, 0.0
    %v144 = vmax.f32 %v112, 0.0
    %v145 = vmax.f32 %v113, 0.0
    %v146 = vmax.f32 %v114, 0.0
    %v147 = vmax.f32 %v115, 0.0
    %v148 = vmax.f32 %v116, 0.0
    %v149 = vmax.f32 %v117, 0.0
    %v150 = vmax.f32 %v118, 0.0
    %v151 = vmax.f32 %v119, 0.0
    %v152 = vmax.f32 %v120, 0.0
    %v153 = vmax.f32 %v121, 0.0
    %v154 = vmax.f32 %v122, 0.0
    %v155 = vand.u32 2147483647, %v107
    %v156 = vand.u32 2147483647, %v108
    %v157 = vand.u32 2147483647, %v109
    %v158 = vand.u32 2147483647, %v110
    %v159 = vand.u32 2147483647, %v111
    %v160 = vand.u32 2147483647, %v112
    %v161 = vand.u32 2147483647, %v113
    %v162 = vand.u32 2147483647, %v114
    %v163 = vand.u32 2147483647, %v115
    %v164 = vand.u32 2147483647, %v116
    %v165 = vand.u32 2147483647, %v117
    %v166 = vand.u32 2147483647, %v118
    %v167 = vand.u32 2147483647, %v119
    %v168 = vand.u32 2147483647, %v120
    %v169 = vand.u32 2147483647, %v121
    %v170 = vand.u32 2147483647, %v122
    %v171 = vsub.f32 0.0, %v155
    %v172 = vsub.f32 0.0, %v156
    %v173 = vsub.f32 0.0, %v157
    %v174 = vsub.f32 0.0, %v158
    %v175 = vsub.f32 0.0, %v159
    %v176 = vsub.f32 0.0, %v160
    %v177 = vsub.f32 0.0, %v161
    %v178 = vsub.f32 0.0, %v162
    %v179 = vsub.f32 0.0, %v163
    %v180 = vsub.f32 0.0, %v164
    %v181 = vsub.f32 0.0, %v165
    %v182 = vsub.f32 0.0, %v166
    %v183 = vsub.f32 0.0, %v167
    %v184 = vsub.f32 0.0, %v168
    %v185 = vsub.f32 0.0, %v169
    %v186 = vsub.f32 0.0, %v170
    %v187 = vmul.f32 %v171, 1.442695
    %v188 = vpow.pop %v187
    %v189 = vmul.f32 %v172, 1.442695
    %v190 = vpow.pop %v189
    %v191 = vmul.f32 %v173, 1.442695
    %v192 = vpow.pop %v191
    %v193 = vmul.f32 %v174, 1.442695
    %v194 = vpow.pop %v193
    %v195 = vmul.f32 %v175, 1.442695
    %v196 = vpow.pop %v195
    %v197 = vmul.f32 %v176, 1.442695
    %v198 = vpow.pop %v197
    %v199 = vmul.f32 %v177, 1.442695
    %v200 = vpow.pop %v199
    %v201 = vmul.f32 %v178, 1.442695
    %v202 = vpow.pop %v201
    %v203 = vmul.f32 %v179, 1.442695
    %v204 = vpow.pop %v203
    %v205 = vmul.f32 %v180, 1.442695
    %v206 = vpow.pop %v205
    %v207 = vmul.f32 %v181, 1.442695
    %v208 = vpow.pop %v207
    %v209 = vmul.f32 %v182, 1.442695
    %v210 = vpow.pop %v209
    %v211 = vmul.f32 %v183, 1.442695
    %v212 = vpow.pop %v211
    %v213 = vmul.f32 %v184, 1.442695
    %v214 = vpow.pop %v213
    %v215 = vmul.f32 %v185, 1.442695
    %v216 = vpow.pop %v215
    %v217 = vmul.f32 %v186, 1.442695
    %v218 = vpow.pop %v217
    %v219 = vadd.f32 %v188, 1.0
    %v220 = vlog2.pop %v219
    %v221 = vmul.f32 %v220, 0.6931472
    %v222 = vmul.f32 -0.5, %v188
    %v223 = vadd.f32 %v222, 1.0
    %v224 = vmul.f32 %v223, %v188
    %v225 = vand.u32 2147483647, %v188
    %vm226 = vcmp.lt.f32.partialorder %v225, 0.0004427343
    %v227 = vsel %vm226, %v224, %v221
    %v228 = vadd.f32 %v190, 1.0
    %v229 = vlog2.pop %v228
    %v230 = vmul.f32 %v229, 0.6931472
    %v231 = vmul.f32 -0.5, %v190
    %v232 = vadd.f32 %v231, 1.0
    %v233 = vmul.f32 %v232, %v190
    %v234 = vand.u32 2147483647, %v190
    %vm235 = vcmp.lt.f32.partialorder %v234, 0.0004427343
    %v236 = vsel %vm235, %v233, %v230
    %v237 = vadd.f32 %v192, 1.0
    %v238 = vlog2.pop %v237
    %v239 = vmul.f32 %v238, 0.6931472
    %v240 = vmul.f32 -0.5, %v192
    %v241 = vadd.f32 %v240, 1.0
    %v242 = vmul.f32 %v241, %v192
    %v243 = vand.u32 2147483647, %v192
    %vm244 = vcmp.lt.f32.partialorder %v243, 0.0004427343
    %v245 = vsel %vm244, %v242, %v239
    %v246 = vadd.f32 %v194, 1.0
    %v247 = vlog2.pop %v246
    %v248 = vmul.f32 %v247, 0.6931472
    %v249 = vmul.f32 -0.5, %v194
    %v250 = vadd.f32 %v249, 1.0
    %v251 = vmul.f32 %v250, %v194
    %v252 = vand.u32 2147483647, %v194
    %vm253 = vcmp.lt.f32.partialorder %v252, 0.0004427343
    %v254 = vsel %vm253, %v251, %v248
    %v255 = vadd.f32 %v196, 1.0
    %v256 = vlog2.pop %v255
    %v257 = vmul.f32 %v256, 0.6931472
    %v258 = vmul.f32 -0.5, %v196
    %v259 = vadd.f32 %v258, 1.0
    %v260 = vmul.f32 %v259, %v196
    %v261 = vand.u32 2147483647, %v196
    %vm262 = vcmp.lt.f32.partialorder %v261, 0.0004427343
    %v263 = vsel %vm262, %v260, %v257
    %v264 = vadd.f32 %v198, 1.0
    %v265 = vlog2.pop %v264
    %v266 = vmul.f32 %v265, 0.6931472
    %v267 = vmul.f32 -0.5, %v198
    %v268 = vadd.f32 %v267, 1.0
    %v269 = vmul.f32 %v268, %v198
    %v270 = vand.u32 2147483647, %v198
    %vm271 = vcmp.lt.f32.partialorder %v270, 0.0004427343
    %v272 = vsel %vm271, %v269, %v266
    %v273 = vadd.f32 %v200, 1.0
    %v274 = vlog2.pop %v273
    %v275 = vmul.f32 %v274, 0.6931472
    %v276 = vmul.f32 -0.5, %v200
    %v277 = vadd.f32 %v276, 1.0
    %v278 = vmul.f32 %v277, %v200
    %v279 = vand.u32 2147483647, %v200
    %vm280 = vcmp.lt.f32.partialorder %v279, 0.0004427343
    %v281 = vsel %vm280, %v278, %v275
    %v282 = vadd.f32 %v202, 1.0
    %v283 = vlog2.pop %v282
    %v284 = vmul.f32 %v283, 0.6931472
    %v285 = vmul.f32 -0.5, %v202
    %v286 = vadd.f32 %v285, 1.0
    %v287 = vmul.f32 %v286, %v202
    %v288 = vand.u32 2147483647, %v202
    %vm289 = vcmp.lt.f32.partialorder %v288, 0.0004427343
    %v290 = vsel %vm289, %v287, %v284
    %v291 = vadd.f32 %v204, 1.0
    %v292 = vlog2.pop %v291
    %v293 = vmul.f32 %v292, 0.6931472
    %v294 = vmul.f32 -0.5, %v204
    %v295 = vadd.f32 %v294, 1.0
    %v296 = vmul.f32 %v295, %v204
    %v297 = vand.u32 2147483647, %v204
    %vm298 = vcmp.lt.f32.partialorder %v297, 0.0004427343
    %v299 = vsel %vm298, %v296, %v293
    %v300 = vadd.f32 %v206, 1.0
    %v301 = vlog2.pop %v300
    %v302 = vmul.f32 %v301, 0.6931472
    %v303 = vmul.f32 -0.5, %v206
    %v304 = vadd.f32 %v303, 1.0
    %v305 = vmul.f32 %v304, %v206
    %v306 = vand.u32 2147483647, %v206
    %vm307 = vcmp.lt.f32.partialorder %v306, 0.0004427343
    %v308 = vsel %vm307, %v305, %v302
    %v309 = vadd.f32 %v208, 1.0
    %v310 = vlog2.pop %v309
    %v311 = vmul.f32 %v310, 0.6931472
    %v312 = vmul.f32 -0.5, %v208
    %v313 = vadd.f32 %v312, 1.0
    %v314 = vmul.f32 %v313, %v208
    %v315 = vand.u32 2147483647, %v208
    %vm316 = vcmp.lt.f32.partialorder %v315, 0.0004427343
    %v317 = vsel %vm316, %v314, %v311
    %v318 = vadd.f32 %v210, 1.0
    %v319 = vlog2.pop %v318
    %v320 = vmul.f32 %v319, 0.6931472
    %v321 = vmul.f32 -0.5, %v210
    %v322 = vadd.f32 %v321, 1.0
    %v323 = vmul.f32 %v322, %v210
    %v324 = vand.u32 2147483647, %v210
    %vm325 = vcmp.lt.f32.partialorder %v324, 0.0004427343
    %v326 = vsel %vm325, %v323, %v320
    %v327 = vadd.f32 %v212, 1.0
    %v328 = vlog2.pop %v327
    %v329 = vmul.f32 %v328, 0.6931472
    %v330 = vmul.f32 -0.5, %v212
    %v331 = vadd.f32 %v330, 1.0
    %v332 = vmul.f32 %v331, %v212
    %v333 = vand.u32 2147483647, %v212
    %vm334 = vcmp.lt.f32.partialorder %v333, 0.0004427343
    %v335 = vsel %vm334, %v332, %v329
    %v336 = vadd.f32 %v214, 1.0
    %v337 = vlog2.pop %v336
    %v338 = vmul.f32 %v337, 0.6931472
    %v339 = vmul.f32 -0.5, %v214
    %v340 = vadd.f32 %v339, 1.0
    %v341 = vmul.f32 %v340, %v214
    %v342 = vand.u32 2147483647, %v214
    %vm343 = vcmp.lt.f32.partialorder %v342, 0.0004427343
    %v344 = vsel %vm343, %v341, %v338
    %v345 = vadd.f32 %v216, 1.0
    %v346 = vlog2.pop %v345
    %v347 = vmul.f32 %v346, 0.6931472
    %v348 = vmul.f32 -0.5, %v216
    %v349 = vadd.f32 %v348, 1.0
    %v350 = vmul.f32 %v349, %v216
    %v351 = vand.u32 2147483647, %v216
    %vm352 = vcmp.lt.f32.partialorder %v351, 0.0004427343
    %v353 = vsel %vm352, %v350, %v347
    %v354 = vadd.f32 %v218, 1.0
    %v355 = vlog2.pop %v354
    %v356 = vmul.f32 %v355, 0.6931472
    %v357 = vmul.f32 -0.5, %v218
    %v358 = vadd.f32 %v357, 1.0
    %v359 = vmul.f32 %v358, %v218
    %v360 = vand.u32 2147483647, %v218
    %vm361 = vcmp.lt.f32.partialorder %v360, 0.0004427343
    %v362 = vsel %vm361, %v359, %v356
    %v363 = vadd.f32 %v139, %v227
    %v364 = vadd.f32 %v140, %v236
    %v365 = vadd.f32 %v141, %v245
    %v366 = vadd.f32 %v142, %v254
    %v367 = vadd.f32 %v143, %v263
    %v368 = vadd.f32 %v144, %v272
    %v369 = vadd.f32 %v145, %v281
    %v370 = vadd.f32 %v146, %v290
    %v371 = vadd.f32 %v147, %v299
    %v372 = vadd.f32 %v148, %v308
    %v373 = vadd.f32 %v149, %v317
    %v374 = vadd.f32 %v150, %v326
    %v375 = vadd.f32 %v151, %v335
    %v376 = vadd.f32 %v152, %v344
    %v377 = vadd.f32 %v153, %v353
    %v378 = vadd.f32 %v154, %v362
    %v379 = vmul.f32 %v363, %v123
    %v380 = vmul.f32 %v364, %v124
    %v381 = vmul.f32 %v365, %v125
    %v382 = vmul.f32 %v366, %v126
    %v383 = vmul.f32 %v367, %v127
    %v384 = vmul.f32 %v368, %v128
    %v385 = vmul.f32 %v369, %v129
    %v386 = vmul.f32 %v370, %v130
    %v387 = vmul.f32 %v371, %v131
    %v388 = vmul.f32 %v372, %v132
    %v389 = vmul.f32 %v373, %v133
    %v390 = vmul.f32 %v374, %v134
    %v391 = vmul.f32 %v375, %v135
    %v392 = vmul.f32 %v376, %v136
    %v393 = vmul.f32 %v377, %v137
    %v394 = vmul.f32 %v378, %v138
    %v395 = vadd.f32 %v91, %v379
    %v396 = vadd.f32 %v92, %v380
    %v397 = vadd.f32 %v93, %v381
    %v398 = vadd.f32 %v94, %v382
    %v399 = vadd.f32 %v95, %v383
    %v400 = vadd.f32 %v96, %v384
    %v401 = vadd.f32 %v97, %v385
    %v402 = vadd.f32 %v98, %v386
    %v403 = vadd.f32 %v99, %v387
    %v404 = vadd.f32 %v100, %v388
    %v405 = vadd.f32 %v101, %v389
    %v406 = vadd.f32 %v102, %v390
    %v407 = vadd.f32 %v103, %v391
    %v408 = vadd.f32 %v104, %v392
    %v409 = vadd.f32 %v105, %v393
    %v410 = vadd.f32 %v106, %v394
    %v411 = vld [vmem:[#allocation2] sm:$0xff]
    %v412 = vld [vmem:[#allocation3] sm:$0xff]
    %413 = vmatprep.subr.mxu0 0.0
    %414 = vmatpush1.xpose.msra.mxu0 %v395
    %415 = vmatprep.subr.mxu0 0.0
    %416 = vmatpush1.xpose.msra.mxu0 %v396
    %417 = vmatprep.subr.mxu0 0.0
    %418 = vmatpush1.xpose.msra.mxu0 %v397
    %419 = vmatprep.subr.mxu0 0.0
    %420 = vmatpush1.xpose.msra.mxu0 %v398
    %421 = vmatprep.subr.mxu0 0.0
    %422 = vmatpush1.xpose.msra.mxu0 %v399
    %423 = vmatprep.subr.mxu0 0.0
    %424 = vmatpush1.xpose.msra.mxu0 %v400
    %425 = vmatprep.subr.mxu0 0.0
    %426 = vmatpush1.xpose.msra.mxu0 %v401
    %427 = vmatprep.subr.mxu0 0.0
    %428 = vmatpush1.xpose.msra.mxu0 %v402
    %429 = vmatprep.subr.mxu0 0.0
    %430 = vmatpush1.xpose.msra.mxu0 %v403
    %431 = vmatprep.subr.mxu0 0.0
    %432 = vmatpush1.xpose.msra.mxu0 %v404
    %433 = vmatprep.subr.mxu0 0.0
    %434 = vmatpush1.xpose.msra.mxu0 %v405
    %435 = vmatprep.subr.mxu0 0.0
    %436 = vmatpush1.xpose.msra.mxu0 %v406
    %437 = vmatprep.subr.mxu0 0.0
    %438 = vmatpush1.xpose.msra.mxu0 %v407
    %439 = vmatprep.subr.mxu0 0.0
    %440 = vmatpush1.xpose.msra.mxu0 %v408
    %441 = vmatprep.subr.mxu0 0.0
    %442 = vmatpush1.xpose.msra.mxu0 %v409
    %443 = vmatprep.subr.mxu0 0.0
    %444 = vmatpush1.xpose.msra.mxu0 %v410
    %445 = vmatprep.subr.mxu0 0.0
    %446 = vmatpush1.xpose.msra.mxu0 0.0
    %447 = vmatprep.subr.mxu0 0.0
    %448 = vmatpush1.xpose.msra.mxu0 0.0
    %449 = vmatprep.subr.mxu0 0.0
    %450 = vmatpush1.xpose.msra.mxu0 0.0
    %451 = vmatprep.subr.mxu0 0.0
    %452 = vmatpush1.xpose.msra.mxu0 0.0
    %453 = vmatprep.subr.mxu0 0.0
    %454 = vmatpush1.xpose.msra.mxu0 0.0
    %455 = vmatprep.subr.mxu0 0.0
    %456 = vmatpush1.xpose.msra.mxu0 0.0
    %457 = vmatprep.subr.mxu0 0.0
    %458 = vmatpush1.xpose.msra.mxu0 0.0
    %459 = vmatprep.subr.mxu0 0.0
    %460 = vmatpush1.xpose.msra.mxu0 0.0
    %461 = vmatprep.subr.mxu0 0.0
    %462 = vmatpush1.xpose.msra.mxu0 0.0
    %463 = vmatprep.subr.mxu0 0.0
    %464 = vmatpush1.xpose.msra.mxu0 0.0
    %465 = vmatprep.subr.mxu0 0.0
    %466 = vmatpush1.xpose.msra.mxu0 0.0
    %467 = vmatprep.subr.mxu0 0.0
    %468 = vmatpush1.xpose.msra.mxu0 0.0
    %469 = vmatprep.subr.mxu0 0.0
    %470 = vmatpush1.xpose.msra.mxu0 0.0
    %471 = vmatprep.subr.mxu0 0.0
    %472 = vmatpush1.xpose.msra.mxu0 0.0
    %473 = vmatprep.subr.mxu0 0.0
    %474 = vmatpush1.xpose.msra.mxu0 0.0
    %475 = vmatprep.subr.mxu0 0.0
    %476 = vmatpush1.xpose.msra.mxu0 0.0
    %477 = vmatprep.mubr.f32.mxu0 0.0
    %478 = vmatmul.mubr.f32.gmra.mrb[0].mxu0 %v412
    %v479 = vpop.f32.mrb[0].mxu0
    %v480 = vadd.f32 0.0, %v479
    %v481 = vpop.f32.mrb[0].mxu0
    %482 = vdwg.mxu0
    %v483 = vadd.f32 %v411, %v480
    %484 = vst [vmem:[#allocation2] sm:$0xff] %v483
    %p485 = scmp.eq.s32.totalorder 0, 0
    // Predicated region
    $region50: #{tpu_custom_call.1} parent=1 // pred_check
      %p486 = pneg %p485
    $region51: #{tpu_custom_call.1} parent=1 // pred_check_branch
      %488 = sbr.rel (%p486) target = $region53
    $region52: #{tpu_custom_call.1} parent=1 // pred_region
      %v489 = vlaneseq
      %v490 = vshrl.u32 %v489, 7
      %v491 = vadd.s32 %v490, 8
      %v492 = vadd.s32 %v490, 16
      %v493 = vadd.s32 %v490, 24
      %v494 = vadd.s32 %v490, 32
      %v495 = vadd.s32 %v490, 40
      %v496 = vadd.s32 %v490, 48
      %v497 = vadd.s32 %v490, 56
      %v498 = vadd.s32 %v490, 64
      %v499 = vadd.s32 %v490, 72
      %v500 = vadd.s32 %v490, 80
      %v501 = vadd.s32 %v490, 88
      %v502 = vadd.s32 %v490, 96
      %v503 = vadd.s32 %v490, 104
      %v504 = vadd.s32 %v490, 112
      %v505 = vadd.s32 %v490, 120
      %s506 = smul.u32 0, 128
      %v507 = vstv %s506
      %v508 = vadd.s32 %v490, %v507
      %v509 = vadd.s32 %v491, %v507
      %v510 = vadd.s32 %v492, %v507
      %v511 = vadd.s32 %v493, %v507
      %v512 = vadd.s32 %v494, %v507
      %v513 = vadd.s32 %v495, %v507
      %v514 = vadd.s32 %v496, %v507
      %v515 = vadd.s32 %v497, %v507
      %v516 = vadd.s32 %v498, %v507
      %v517 = vadd.s32 %v499, %v507
      %v518 = vadd.s32 %v500, %v507
      %v519 = vadd.s32 %v501, %v507
      %v520 = vadd.s32 %v502, %v507
      %v521 = vadd.s32 %v503, %v507
      %v522 = vadd.s32 %v504, %v507
      %v523 = vadd.s32 %v505, %v507
      %v524 = vlaneseq
      %v525 = vand.u32 %v524, 127
      %s526 = smul.u32 0, 128
      %v527 = vstv %s526
      %v528 = vadd.s32 %v525, %v527
      %vm529 = vcmp.lt.s32.totalorder %v508, 16
      %vm530 = vcmp.lt.s32.totalorder %v509, 16
      %vm531 = vcmp.lt.s32.totalorder %v510, 16
      %vm532 = vcmp.lt.s32.totalorder %v511, 16
      %vm533 = vcmp.lt.s32.totalorder %v512, 16
      %vm534 = vcmp.lt.s32.totalorder %v513, 16
      %vm535 = vcmp.lt.s32.totalorder %v514, 16
      %vm536 = vcmp.lt.s32.totalorder %v515, 16
      %vm537 = vcmp.lt.s32.totalorder %v516, 16
      %vm538 = vcmp.lt.s32.totalorder %v517, 16
      %vm539 = vcmp.lt.s32.totalorder %v518, 16
      %vm540 = vcmp.lt.s32.totalorder %v519, 16
      %vm541 = vcmp.lt.s32.totalorder %v520, 16
      %vm542 = vcmp.lt.s32.totalorder %v521, 16
      %vm543 = vcmp.lt.s32.totalorder %v522, 16
      %vm544 = vcmp.lt.s32.totalorder %v523, 16
      %vm545 = vcmp.lt.s32.totalorder %v528, 32
      %vm546 = vmand %vm529, %vm545
      %vm547 = vmand %vm530, %vm545
      %vm548 = vmand %vm531, %vm545
      %vm549 = vmand %vm532, %vm545
      %vm550 = vmand %vm533, %vm545
      %vm551 = vmand %vm534, %vm545
      %vm552 = vmand %vm535, %vm545
      %vm553 = vmand %vm536, %vm545
      %vm554 = vmand %vm537, %vm545
      %vm555 = vmand %vm538, %vm545
      %vm556 = vmand %vm539, %vm545
      %vm557 = vmand %vm540, %vm545
      %vm558 = vmand %vm541, %vm545
      %vm559 = vmand %vm542, %vm545
      %vm560 = vmand %vm543, %vm545
      %vm561 = vmand %vm544, %vm545
      %v562 = vlog2.pop %v363
      %v563 = vmul.f32 %v562, 0.6931472
      %v564 = vlog2.pop %v364
      %v565 = vmul.f32 %v564, 0.6931472
      %v566 = vlog2.pop %v365
      %v567 = vmul.f32 %v566, 0.6931472
      %v568 = vlog2.pop %v366
      %v569 = vmul.f32 %v568, 0.6931472
      %v570 = vlog2.pop %v367
      %v571 = vmul.f32 %v570, 0.6931472
      %v572 = vlog2.pop %v368
      %v573 = vmul.f32 %v572, 0.6931472
      %v574 = vlog2.pop %v369
      %v575 = vmul.f32 %v574, 0.6931472
      %v576 = vlog2.pop %v370
      %v577 = vmul.f32 %v576, 0.6931472
      %v578 = vlog2.pop %v371
      %v579 = vmul.f32 %v578, 0.6931472
      %v580 = vlog2.pop %v372
      %v581 = vmul.f32 %v580, 0.6931472
      %v582 = vlog2.pop %v373
      %v583 = vmul.f32 %v582, 0.6931472
      %v584 = vlog2.pop %v374
      %v585 = vmul.f32 %v584, 0.6931472
      %v586 = vlog2.pop %v375
      %v587 = vmul.f32 %v586, 0.6931472
      %v588 = vlog2.pop %v376
      %v589 = vmul.f32 %v588, 0.6931472
      %v590 = vlog2.pop %v377
      %v591 = vmul.f32 %v590, 0.6931472
      %v592 = vlog2.pop %v378
      %v593 = vmul.f32 %v592, 0.6931472
      %v594 = vsub.f32 -0.9189385, %v563
      %v595 = vsub.f32 -0.9189385, %v565
      %v596 = vsub.f32 -0.9189385, %v567
      %v597 = vsub.f32 -0.9189385, %v569
      %v598 = vsub.f32 -0.9189385, %v571
      %v599 = vsub.f32 -0.9189385, %v573
      %v600 = vsub.f32 -0.9189385, %v575
      %v601 = vsub.f32 -0.9189385, %v577
      %v602 = vsub.f32 -0.9189385, %v579
      %v603 = vsub.f32 -0.9189385, %v581
      %v604 = vsub.f32 -0.9189385, %v583
      %v605 = vsub.f32 -0.9189385, %v585
      %v606 = vsub.f32 -0.9189385, %v587
      %v607 = vsub.f32 -0.9189385, %v589
      %v608 = vsub.f32 -0.9189385, %v591
      %v609 = vsub.f32 -0.9189385, %v593
      %v610 = vmul.f32 %v123, 0.5
      %v611 = vmul.f32 %v124, 0.5
      %v612 = vmul.f32 %v125, 0.5
      %v613 = vmul.f32 %v126, 0.5
      %v614 = vmul.f32 %v127, 0.5
      %v615 = vmul.f32 %v128, 0.5
      %v616 = vmul.f32 %v129, 0.5
      %v617 = vmul.f32 %v130, 0.5
      %v618 = vmul.f32 %v131, 0.5
      %v619 = vmul.f32 %v132, 0.5
      %v620 = vmul.f32 %v133, 0.5
      %v621 = vmul.f32 %v134, 0.5
      %v622 = vmul.f32 %v135, 0.5
      %v623 = vmul.f32 %v136, 0.5
      %v624 = vmul.f32 %v137, 0.5
      %v625 = vmul.f32 %v138, 0.5
      %v626 = vmul.f32 %v610, %v123
      %v627 = vmul.f32 %v611, %v124
      %v628 = vmul.f32 %v612, %v125
      %v629 = vmul.f32 %v613, %v126
      %v630 = vmul.f32 %v614, %v127
      %v631 = vmul.f32 %v615, %v128
      %v632 = vmul.f32 %v616, %v129
      %v633 = vmul.f32 %v617, %v130
      %v634 = vmul.f32 %v618, %v131
      %v635 = vmul.f32 %v619, %v132
      %v636 = vmul.f32 %v620, %v133
      %v637 = vmul.f32 %v621, %v134
      %v638 = vmul.f32 %v622, %v135
      %v639 = vmul.f32 %v623, %v136
      %v640 = vmul.f32 %v624, %v137
      %v641 = vmul.f32 %v625, %v138
      %v642 = vsub.f32 %v594, %v626
      %v643 = vsub.f32 %v595, %v627
      %v644 = vsub.f32 %v596, %v628
      %v645 = vsub.f32 %v597, %v629
      %v646 = vsub.f32 %v598, %v630
      %v647 = vsub.f32 %v599, %v631
      %v648 = vsub.f32 %v600, %v632
      %v649 = vsub.f32 %v601, %v633
      %v650 = vsub.f32 %v602, %v634
      %v651 = vsub.f32 %v603, %v635
      %v652 = vsub.f32 %v604, %v636
      %v653 = vsub.f32 %v605, %v637
      %v654 = vsub.f32 %v606, %v638
      %v655 = vsub.f32 %v607, %v639
      %v656 = vsub.f32 %v608, %v640
      %v657 = vsub.f32 %v609, %v641
      %v658 = vmul.f32 %v395, %v395
      %v659 = vmul.f32 %v396, %v396
      %v660 = vmul.f32 %v397, %v397
      %v661 = vmul.f32 %v398, %v398
      %v662 = vmul.f32 %v399, %v399
      %v663 = vmul.f32 %v400, %v400
      %v664 = vmul.f32 %v401, %v401
      %v665 = vmul.f32 %v402, %v402
      %v666 = vmul.f32 %v403, %v403
      %v667 = vmul.f32 %v404, %v404
      %v668 = vmul.f32 %v405, %v405
      %v669 = vmul.f32 %v406, %v406
      %v670 = vmul.f32 %v407, %v407
      %v671 = vmul.f32 %v408, %v408
      %v672 = vmul.f32 %v409, %v409
      %v673 = vmul.f32 %v410, %v410
      %v674 = vmul.f32 %v658, 0.5
      %v675 = vmul.f32 %v659, 0.5
      %v676 = vmul.f32 %v660, 0.5
      %v677 = vmul.f32 %v661, 0.5
      %v678 = vmul.f32 %v662, 0.5
      %v679 = vmul.f32 %v663, 0.5
      %v680 = vmul.f32 %v664, 0.5
      %v681 = vmul.f32 %v665, 0.5
      %v682 = vmul.f32 %v666, 0.5
      %v683 = vmul.f32 %v667, 0.5
      %v684 = vmul.f32 %v668, 0.5
      %v685 = vmul.f32 %v669, 0.5
      %v686 = vmul.f32 %v670, 0.5
      %v687 = vmul.f32 %v671, 0.5
      %v688 = vmul.f32 %v672, 0.5
      %v689 = vmul.f32 %v673, 0.5
      %v690 = vsub.f32 -1.6120857, %v674
      %v691 = vsub.f32 -1.6120857, %v675
      %v692 = vsub.f32 -1.6120857, %v676
      %v693 = vsub.f32 -1.6120857, %v677
      %v694 = vsub.f32 -1.6120857, %v678
      %v695 = vsub.f32 -1.6120857, %v679
      %v696 = vsub.f32 -1.6120857, %v680
      %v697 = vsub.f32 -1.6120857, %v681
      %v698 = vsub.f32 -1.6120857, %v682
      %v699 = vsub.f32 -1.6120857, %v683
      %v700 = vsub.f32 -1.6120857, %v684
      %v701 = vsub.f32 -1.6120857, %v685
      %v702 = vsub.f32 -1.6120857, %v686
      %v703 = vsub.f32 -1.6120857, %v687
      %v704 = vsub.f32 -1.6120857, %v688
      %v705 = vsub.f32 -1.6120857, %v689
      %v706 = vmul.f32 %v395, 403.4288
      %v707 = vmul.f32 %v396, 403.4288
      %v708 = vmul.f32 %v397, 403.4288
      %v709 = vmul.f32 %v398, 403.4288
      %v710 = vmul.f32 %v399, 403.4288
      %v711 = vmul.f32 %v400, 403.4288
      %v712 = vmul.f32 %v401, 403.4288
      %v713 = vmul.f32 %v402, 403.4288
      %v714 = vmul.f32 %v403, 403.4288
      %v715 = vmul.f32 %v404, 403.4288
      %v716 = vmul.f32 %v405, 403.4288
      %v717 = vmul.f32 %v406, 403.4288
      %v718 = vmul.f32 %v407, 403.4288
      %v719 = vmul.f32 %v408, 403.4288
      %v720 = vmul.f32 %v409, 403.4288
      %v721 = vmul.f32 %v410, 403.4288
      %v722 = vmul.f32 %v706, %v706
      %v723 = vmul.f32 %v707, %v707
      %v724 = vmul.f32 %v708, %v708
      %v725 = vmul.f32 %v709, %v709
      %v726 = vmul.f32 %v710, %v710
      %v727 = vmul.f32 %v711, %v711
      %v728 = vmul.f32 %v712, %v712
      %v729 = vmul.f32 %v713, %v713
      %v730 = vmul.f32 %v714, %v714
      %v731 = vmul.f32 %v715, %v715
      %v732 = vmul.f32 %v716, %v716
      %v733 = vmul.f32 %v717, %v717
      %v734 = vmul.f32 %v718, %v718
      %v735 = vmul.f32 %v719, %v719
      %v736 = vmul.f32 %v720, %v720
      %v737 = vmul.f32 %v721, %v721
      %v738 = vmul.f32 %v722, 0.5
      %v739 = vmul.f32 %v723, 0.5
      %v740 = vmul.f32 %v724, 0.5
      %v741 = vmul.f32 %v725, 0.5
      %v742 = vmul.f32 %v726, 0.5
      %v743 = vmul.f32 %v727, 0.5
      %v744 = vmul.f32 %v728, 0.5
      %v745 = vmul.f32 %v729, 0.5
      %v746 = vmul.f32 %v730, 0.5
      %v747 = vmul.f32 %v731, 0.5
      %v748 = vmul.f32 %v732, 0.5
      %v749 = vmul.f32 %v733, 0.5
      %v750 = vmul.f32 %v734, 0.5
      %v751 = vmul.f32 %v735, 0.5
      %v752 = vmul.f32 %v736, 0.5
      %v753 = vmul.f32 %v737, 0.5
      %v754 = vsub.f32 4.387914, %v738
      %v755 = vsub.f32 4.387914, %v739
      %v756 = vsub.f32 4.387914, %v740
      %v757 = vsub.f32 4.387914, %v741
      %v758 = vsub.f32 4.387914, %v742
      %v759 = vsub.f32 4.387914, %v743
      %v760 = vsub.f32 4.387914, %v744
      %v761 = vsub.f32 4.387914, %v745
      %v762 = vsub.f32 4.387914, %v746
      %v763 = vsub.f32 4.387914, %v747
      %v764 = vsub.f32 4.387914, %v748
      %v765 = vsub.f32 4.387914, %v749
      %v766 = vsub.f32 4.387914, %v750
      %v767 = vsub.f32 4.387914, %v751
      %v768 = vsub.f32 4.387914, %v752
      %v769 = vsub.f32 4.387914, %v753
      %v770 = vmax.f32 %v690, %v754
      %v771 = vmax.f32 %v691, %v755
      %v772 = vmax.f32 %v692, %v756
      %v773 = vmax.f32 %v693, %v757
      %v774 = vmax.f32 %v694, %v758
      %v775 = vmax.f32 %v695, %v759
      %v776 = vmax.f32 %v696, %v760
      %v777 = vmax.f32 %v697, %v761
      %v778 = vmax.f32 %v698, %v762
      %v779 = vmax.f32 %v699, %v763
      %v780 = vmax.f32 %v700, %v764
      %v781 = vmax.f32 %v701, %v765
      %v782 = vmax.f32 %v702, %v766
      %v783 = vmax.f32 %v703, %v767
      %v784 = vmax.f32 %v704, %v768
      %v785 = vmax.f32 %v705, %v769
      %v786 = vsub.f32 %v690, %v754
      %v787 = vsub.f32 %v691, %v755
      %v788 = vsub.f32 %v692, %v756
      %v789 = vsub.f32 %v693, %v757
      %v790 = vsub.f32 %v694, %v758
      %v791 = vsub.f32 %v695, %v759
      %v792 = vsub.f32 %v696, %v760
      %v793 = vsub.f32 %v697, %v761
      %v794 = vsub.f32 %v698, %v762
      %v795 = vsub.f32 %v699, %v763
      %v796 = vsub.f32 %v700, %v764
      %v797 = vsub.f32 %v701, %v765
      %v798 = vsub.f32 %v702, %v766
      %v799 = vsub.f32 %v703, %v767
      %v800 = vsub.f32 %v704, %v768
      %v801 = vsub.f32 %v705, %v769
      %v802 = vand.u32 2147483647, %v786
      %v803 = vand.u32 2147483647, %v787
      %v804 = vand.u32 2147483647, %v788
      %v805 = vand.u32 2147483647, %v789
      %v806 = vand.u32 2147483647, %v790
      %v807 = vand.u32 2147483647, %v791
      %v808 = vand.u32 2147483647, %v792
      %v809 = vand.u32 2147483647, %v793
      %v810 = vand.u32 2147483647, %v794
      %v811 = vand.u32 2147483647, %v795
      %v812 = vand.u32 2147483647, %v796
      %v813 = vand.u32 2147483647, %v797
      %v814 = vand.u32 2147483647, %v798
      %v815 = vand.u32 2147483647, %v799
      %v816 = vand.u32 2147483647, %v800
      %v817 = vand.u32 2147483647, %v801
      %v818 = vsub.f32 0.0, %v802
      %v819 = vsub.f32 0.0, %v803
      %v820 = vsub.f32 0.0, %v804
      %v821 = vsub.f32 0.0, %v805
      %v822 = vsub.f32 0.0, %v806
      %v823 = vsub.f32 0.0, %v807
      %v824 = vsub.f32 0.0, %v808
      %v825 = vsub.f32 0.0, %v809
      %v826 = vsub.f32 0.0, %v810
      %v827 = vsub.f32 0.0, %v811
      %v828 = vsub.f32 0.0, %v812
      %v829 = vsub.f32 0.0, %v813
      %v830 = vsub.f32 0.0, %v814
      %v831 = vsub.f32 0.0, %v815
      %v832 = vsub.f32 0.0, %v816
      %v833 = vsub.f32 0.0, %v817
      %v834 = vmul.f32 %v818, 1.442695
      %v835 = vpow.pop %v834
      %v836 = vmul.f32 %v819, 1.442695
      %v837 = vpow.pop %v836
      %v838 = vmul.f32 %v820, 1.442695
      %v839 = vpow.pop %v838
      %v840 = vmul.f32 %v821, 1.442695
      %v841 = vpow.pop %v840
      %v842 = vmul.f32 %v822, 1.442695
      %v843 = vpow.pop %v842
      %v844 = vmul.f32 %v823, 1.442695
      %v845 = vpow.pop %v844
      %v846 = vmul.f32 %v824, 1.442695
      %v847 = vpow.pop %v846
      %v848 = vmul.f32 %v825, 1.442695
      %v849 = vpow.pop %v848
      %v850 = vmul.f32 %v826, 1.442695
      %v851 = vpow.pop %v850
      %v852 = vmul.f32 %v827, 1.442695
      %v853 = vpow.pop %v852
      %v854 = vmul.f32 %v828, 1.442695
      %v855 = vpow.pop %v854
      %v856 = vmul.f32 %v829, 1.442695
      %v857 = vpow.pop %v856
      %v858 = vmul.f32 %v830, 1.442695
      %v859 = vpow.pop %v858
      %v860 = vmul.f32 %v831, 1.442695
      %v861 = vpow.pop %v860
      %v862 = vmul.f32 %v832, 1.442695
      %v863 = vpow.pop %v862
      %v864 = vmul.f32 %v833, 1.442695
      %v865 = vpow.pop %v864
      %v866 = vadd.f32 %v835, 1.0
      %v867 = vlog2.pop %v866
      %v868 = vmul.f32 %v867, 0.6931472
      %v869 = vmul.f32 -0.5, %v835
      %v870 = vadd.f32 %v869, 1.0
      %v871 = vmul.f32 %v870, %v835
      %v872 = vand.u32 2147483647, %v835
      %vm873 = vcmp.lt.f32.partialorder %v872, 0.0004427343
      %v874 = vsel %vm873, %v871, %v868
      %v875 = vadd.f32 %v837, 1.0
      %v876 = vlog2.pop %v875
      %v877 = vmul.f32 %v876, 0.6931472
      %v878 = vmul.f32 -0.5, %v837
      %v879 = vadd.f32 %v878, 1.0
      %v880 = vmul.f32 %v879, %v837
      %v881 = vand.u32 2147483647, %v837
      %vm882 = vcmp.lt.f32.partialorder %v881, 0.0004427343
      %v883 = vsel %vm882, %v880, %v877
      %v884 = vadd.f32 %v839, 1.0
      %v885 = vlog2.pop %v884
      %v886 = vmul.f32 %v885, 0.6931472
      %v887 = vmul.f32 -0.5, %v839
      %v888 = vadd.f32 %v887, 1.0
      %v889 = vmul.f32 %v888, %v839
      %v890 = vand.u32 2147483647, %v839
      %vm891 = vcmp.lt.f32.partialorder %v890, 0.0004427343
      %v892 = vsel %vm891, %v889, %v886
      %v893 = vadd.f32 %v841, 1.0
      %v894 = vlog2.pop %v893
      %v895 = vmul.f32 %v894, 0.6931472
      %v896 = vmul.f32 -0.5, %v841
      %v897 = vadd.f32 %v896, 1.0
      %v898 = vmul.f32 %v897, %v841
      %v899 = vand.u32 2147483647, %v841
      %vm900 = vcmp.lt.f32.partialorder %v899, 0.0004427343
      %v901 = vsel %vm900, %v898, %v895
      %v902 = vadd.f32 %v843, 1.0
      %v903 = vlog2.pop %v902
      %v904 = vmul.f32 %v903, 0.6931472
      %v905 = vmul.f32 -0.5, %v843
      %v906 = vadd.f32 %v905, 1.0
      %v907 = vmul.f32 %v906, %v843
      %v908 = vand.u32 2147483647, %v843
      %vm909 = vcmp.lt.f32.partialorder %v908, 0.0004427343
      %v910 = vsel %vm909, %v907, %v904
      %v911 = vadd.f32 %v845, 1.0
      %v912 = vlog2.pop %v911
      %v913 = vmul.f32 %v912, 0.6931472
      %v914 = vmul.f32 -0.5, %v845
      %v915 = vadd.f32 %v914, 1.0
      %v916 = vmul.f32 %v915, %v845
      %v917 = vand.u32 2147483647, %v845
      %vm918 = vcmp.lt.f32.partialorder %v917, 0.0004427343
      %v919 = vsel %vm918, %v916, %v913
      %v920 = vadd.f32 %v847, 1.0
      %v921 = vlog2.pop %v920
      %v922 = vmul.f32 %v921, 0.6931472
      %v923 = vmul.f32 -0.5, %v847
      %v924 = vadd.f32 %v923, 1.0
      %v925 = vmul.f32 %v924, %v847
      %v926 = vand.u32 2147483647, %v847
      %vm927 = vcmp.lt.f32.partialorder %v926, 0.0004427343
      %v928 = vsel %vm927, %v925, %v922
      %v929 = vadd.f32 %v849, 1.0
      %v930 = vlog2.pop %v929
      %v931 = vmul.f32 %v930, 0.6931472
      %v932 = vmul.f32 -0.5, %v849
      %v933 = vadd.f32 %v932, 1.0
      %v934 = vmul.f32 %v933, %v849
      %v935 = vand.u32 2147483647, %v849
      %vm936 = vcmp.lt.f32.partialorder %v935, 0.0004427343
      %v937 = vsel %vm936, %v934, %v931
      %v938 = vadd.f32 %v851, 1.0
      %v939 = vlog2.pop %v938
      %v940 = vmul.f32 %v939, 0.6931472
      %v941 = vmul.f32 -0.5, %v851
      %v942 = vadd.f32 %v941, 1.0
      %v943 = vmul.f32 %v942, %v851
      %v944 = vand.u32 2147483647, %v851
      %vm945 = vcmp.lt.f32.partialorder %v944, 0.0004427343
      %v946 = vsel %vm945, %v943, %v940
      %v947 = vadd.f32 %v853, 1.0
      %v948 = vlog2.pop %v947
      %v949 = vmul.f32 %v948, 0.6931472
      %v950 = vmul.f32 -0.5, %v853
      %v951 = vadd.f32 %v950, 1.0
      %v952 = vmul.f32 %v951, %v853
      %v953 = vand.u32 2147483647, %v853
      %vm954 = vcmp.lt.f32.partialorder %v953, 0.0004427343
      %v955 = vsel %vm954, %v952, %v949
      %v956 = vadd.f32 %v855, 1.0
      %v957 = vlog2.pop %v956
      %v958 = vmul.f32 %v957, 0.6931472
      %v959 = vmul.f32 -0.5, %v855
      %v960 = vadd.f32 %v959, 1.0
      %v961 = vmul.f32 %v960, %v855
      %v962 = vand.u32 2147483647, %v855
      %vm963 = vcmp.lt.f32.partialorder %v962, 0.0004427343
      %v964 = vsel %vm963, %v961, %v958
      %v965 = vadd.f32 %v857, 1.0
      %v966 = vlog2.pop %v965
      %v967 = vmul.f32 %v966, 0.6931472
      %v968 = vmul.f32 -0.5, %v857
      %v969 = vadd.f32 %v968, 1.0
      %v970 = vmul.f32 %v969, %v857
      %v971 = vand.u32 2147483647, %v857
      %vm972 = vcmp.lt.f32.partialorder %v971, 0.0004427343
      %v973 = vsel %vm972, %v970, %v967
      %v974 = vadd.f32 %v859, 1.0
      %v975 = vlog2.pop %v974
      %v976 = vmul.f32 %v975, 0.6931472
      %v977 = vmul.f32 -0.5, %v859
      %v978 = vadd.f32 %v977, 1.0
      %v979 = vmul.f32 %v978, %v859
      %v980 = vand.u32 2147483647, %v859
      %vm981 = vcmp.lt.f32.partialorder %v980, 0.0004427343
      %v982 = vsel %vm981, %v979, %v976
      %v983 = vadd.f32 %v861, 1.0
      %v984 = vlog2.pop %v983
      %v985 = vmul.f32 %v984, 0.6931472
      %v986 = vmul.f32 -0.5, %v861
      %v987 = vadd.f32 %v986, 1.0
      %v988 = vmul.f32 %v987, %v861
      %v989 = vand.u32 2147483647, %v861
      %vm990 = vcmp.lt.f32.partialorder %v989, 0.0004427343
      %v991 = vsel %vm990, %v988, %v985
      %v992 = vadd.f32 %v863, 1.0
      %v993 = vlog2.pop %v992
      %v994 = vmul.f32 %v993, 0.6931472
      %v995 = vmul.f32 -0.5, %v863
      %v996 = vadd.f32 %v995, 1.0
      %v997 = vmul.f32 %v996, %v863
      %v998 = vand.u32 2147483647, %v863
      %vm999 = vcmp.lt.f32.partialorder %v998, 0.0004427343
      %v1000 = vsel %vm999, %v997, %v994
      %v1001 = vadd.f32 %v865, 1.0
      %v1002 = vlog2.pop %v1001
      %v1003 = vmul.f32 %v1002, 0.6931472
      %v1004 = vmul.f32 -0.5, %v865
      %v1005 = vadd.f32 %v1004, 1.0
      %v1006 = vmul.f32 %v1005, %v865
      %v1007 = vand.u32 2147483647, %v865
      %vm1008 = vcmp.lt.f32.partialorder %v1007, 0.0004427343
      %v1009 = vsel %vm1008, %v1006, %v1003
      %v1010 = vadd.f32 %v770, %v874
      %v1011 = vadd.f32 %v771, %v883
      %v1012 = vadd.f32 %v772, %v892
      %v1013 = vadd.f32 %v773, %v901
      %v1014 = vadd.f32 %v774, %v910
      %v1015 = vadd.f32 %v775, %v919
      %v1016 = vadd.f32 %v776, %v928
      %v1017 = vadd.f32 %v777, %v937
      %v1018 = vadd.f32 %v778, %v946
      %v1019 = vadd.f32 %v779, %v955
      %v1020 = vadd.f32 %v780, %v964
      %v1021 = vadd.f32 %v781, %v973
      %v1022 = vadd.f32 %v782, %v982
      %v1023 = vadd.f32 %v783, %v991
      %v1024 = vadd.f32 %v784, %v1000
      %v1025 = vadd.f32 %v785, %v1009
      %v1026 = vld [vmem:[#allocation12] sm:$0xff]
      %v1027 = vsel %vm546, %v1010, 0.0
      %v1028 = vsel %vm547, %v1011, 0.0
      %v1029 = vsel %vm548, %v1012, 0.0
      %v1030 = vsel %vm549, %v1013, 0.0
      %v1031 = vsel %vm550, %v1014, 0.0
      %v1032 = vsel %vm551, %v1015, 0.0
      %v1033 = vsel %vm552, %v1016, 0.0
      %v1034 = vsel %vm553, %v1017, 0.0
      %v1035 = vsel %vm554, %v1018, 0.0
      %v1036 = vsel %vm555, %v1019, 0.0
      %v1037 = vsel %vm556, %v1020, 0.0
      %v1038 = vsel %vm557, %v1021, 0.0
      %v1039 = vsel %vm558, %v1022, 0.0
      %v1040 = vsel %vm559, %v1023, 0.0
      %v1041 = vsel %vm560, %v1024, 0.0
      %v1042 = vsel %vm561, %v1025, 0.0
      %v1043 = vadd.f32 %v1027, %v1028
      %v1044 = vadd.f32 %v1043, %v1029
      %v1045 = vadd.f32 %v1044, %v1030
      %v1046 = vadd.f32 %v1045, %v1031
      %v1047 = vadd.f32 %v1046, %v1032
      %v1048 = vadd.f32 %v1047, %v1033
      %v1049 = vadd.f32 %v1048, %v1034
      %v1050 = vadd.f32 %v1049, %v1035
      %v1051 = vadd.f32 %v1050, %v1036
      %v1052 = vadd.f32 %v1051, %v1037
      %v1053 = vadd.f32 %v1052, %v1038
      %v1054 = vadd.f32 %v1053, %v1039
      %v1055 = vadd.f32 %v1054, %v1040
      %v1056 = vadd.f32 %v1055, %v1041
      %v1057 = vadd.f32 %v1056, %v1042
      %1058 = vadd.xlane.f32.xlu0 %v1057
      %v1059 = vpop.xlane.xlu0 %1058
      %v1060 = vrot.slane %v1059, 4
      %v1061 = vadd.f32 %v1059, %v1060
      %v1062 = vrot.slane %v1061, 2
      %v1063 = vadd.f32 %v1061, %v1062
      %v1064 = vrot.slane %v1063, 1
      %v1065 = vadd.f32 %v1063, %v1064
      %s1066 = vtos %v1065
      %v1067 = vstv %s1066
      %v1068 = vadd.f32 %v1026, %v1067
      %1069 = vst [vmem:[#allocation12] sm:$0xff] %v1068
      %v1070 = vld [vmem:[#allocation14] sm:$0xff]
      %v1071 = vsel %vm546, %v642, 0.0
      %v1072 = vsel %vm547, %v643, 0.0
      %v1073 = vsel %vm548, %v644, 0.0
      %v1074 = vsel %vm549, %v645, 0.0
      %v1075 = vsel %vm550, %v646, 0.0
      %v1076 = vsel %vm551, %v647, 0.0
      %v1077 = vsel %vm552, %v648, 0.0
      %v1078 = vsel %vm553, %v649, 0.0
      %v1079 = vsel %vm554, %v650, 0.0
      %v1080 = vsel %vm555, %v651, 0.0
      %v1081 = vsel %vm556, %v652, 0.0
      %v1082 = vsel %vm557, %v653, 0.0
      %v1083 = vsel %vm558, %v654, 0.0
      %v1084 = vsel %vm559, %v655, 0.0
      %v1085 = vsel %vm560, %v656, 0.0
      %v1086 = vsel %vm561, %v657, 0.0
      %v1087 = vadd.f32 %v1071, %v1072
      %v1088 = vadd.f32 %v1087, %v1073
      %v1089 = vadd.f32 %v1088, %v1074
      %v1090 = vadd.f32 %v1089, %v1075
      %v1091 = vadd.f32 %v1090, %v1076
      %v1092 = vadd.f32 %v1091, %v1077
      %v1093 = vadd.f32 %v1092, %v1078
      %v1094 = vadd.f32 %v1093, %v1079
      %v1095 = vadd.f32 %v1094, %v1080
      %v1096 = vadd.f32 %v1095, %v1081
      %v1097 = vadd.f32 %v1096, %v1082
      %v1098 = vadd.f32 %v1097, %v1083
      %v1099 = vadd.f32 %v1098, %v1084
      %v1100 = vadd.f32 %v1099, %v1085
      %v1101 = vadd.f32 %v1100, %v1086
      %1102 = vadd.xlane.f32.xlu0 %v1101
      %v1103 = vpop.xlane.xlu0 %1102
      %v1104 = vrot.slane %v1103, 4
      %v1105 = vadd.f32 %v1103, %v1104
      %v1106 = vrot.slane %v1105, 2
      %v1107 = vadd.f32 %v1105, %v1106
      %v1108 = vrot.slane %v1107, 1
      %v1109 = vadd.f32 %v1107, %v1108
      %s1110 = vtos %v1109
      %v1111 = vstv %s1110
      %v1112 = vadd.f32 %v1070, %v1111
      %1113 = vst [vmem:[#allocation14] sm:$0xff] %v1112
    $region53: #{tpu_custom_call.1} parent=1 // pred_fallthru
      _
    %p1114 = pnand %p485, %p84
    %p1115 = pneg %p1114
    // Predicated region
    $region54: #{tpu_custom_call.1} parent=1 // pred_check
      _
    $region55: #{tpu_custom_call.1} parent=1 // pred_check_branch
      %1117 = sbr.rel (%p1114) target = $region57
    $region56: #{tpu_custom_call.1} parent=1 // pred_region
      %v1118 = vld [vmem:[%s4] sm:$0x1]
      %v1119 = vld [vmem:[%s5] sm:$0x1]
      %v1120 = vld [vmem:[%s6] sm:$0x1]
      %v1121 = vmax.f32 %v1119, 0.0
      %v1122 = vand.u32 2147483647, %v1119
      %v1123 = vsub.f32 0.0, %v1122
      %v1124 = vmul.f32 %v1123, 1.442695
      %v1125 = vpow.pop %v1124
      %v1126 = vadd.f32 %v1125, 1.0
      %v1127 = vlog2.pop %v1126
      %v1128 = vmul.f32 %v1127, 0.6931472
      %v1129 = vmul.f32 -0.5, %v1125
      %v1130 = vadd.f32 %v1129, 1.0
      %v1131 = vmul.f32 %v1130, %v1125
      %v1132 = vand.u32 2147483647, %v1125
      %vm1133 = vcmp.lt.f32.partialorder %v1132, 0.0004427343
      %v1134 = vsel %vm1133, %v1131, %v1128
      %v1135 = vadd.f32 %v1121, %v1134
      %v1136 = vmul.f32 %v1135, %v1120
      %v1137 = vadd.f32 %v1118, %v1136
      %v1138 = vlaneseq
      %v1139 = vand.u32 %v1138, 127
      %s1140 = smul.u32 0, 128
      %v1141 = vstv %s1140
      %v1142 = vadd.s32 %v1139, %v1141
      %vm1143 = vcmp.lt.s32.totalorder %v1142, 16
      %v1144 = vlog2.pop %v1135
      %v1145 = vmul.f32 %v1144, 0.6931472
      %v1146 = vsub.f32 -0.9189385, %v1145
      %v1147 = vmul.f32 %v1120, 0.5
      %v1148 = vmul.f32 %v1147, %v1120
      %v1149 = vsub.f32 %v1146, %v1148
      %v1150 = vmul.f32 %v1137, %v1137
      %v1151 = vmul.f32 %v1150, 0.5
      %v1152 = vsub.f32 -1.6120857, %v1151
      %v1153 = vmul.f32 %v1137, 403.4288
      %v1154 = vmul.f32 %v1153, %v1153
      %v1155 = vmul.f32 %v1154, 0.5
      %v1156 = vsub.f32 4.387914, %v1155
      %v1157 = vmax.f32 %v1152, %v1156
      %v1158 = vsub.f32 %v1152, %v1156
      %v1159 = vand.u32 2147483647, %v1158
      %v1160 = vsub.f32 0.0, %v1159
      %v1161 = vmul.f32 %v1160, 1.442695
      %v1162 = vpow.pop %v1161
      %v1163 = vadd.f32 %v1162, 1.0
      %v1164 = vlog2.pop %v1163
      %v1165 = vmul.f32 %v1164, 0.6931472
      %v1166 = vmul.f32 -0.5, %v1162
      %v1167 = vadd.f32 %v1166, 1.0
      %v1168 = vmul.f32 %v1167, %v1162
      %v1169 = vand.u32 2147483647, %v1162
      %vm1170 = vcmp.lt.f32.partialorder %v1169, 0.0004427343
      %v1171 = vsel %vm1170, %v1168, %v1165
      %v1172 = vadd.f32 %v1157, %v1171
      %v1173 = vld [vmem:[#allocation12] sm:$0xff]
      %v1174 = vsel %vm1143, %v1172, 0.0
      %vm1175 = vcmask 1040384
      %v1176 = vsel %vm1175, %v1174, 0.0
      %1177 = vadd.xlane.f32.xlu0 %v1176
      %v1178 = vpop.xlane.xlu0 %1177
      %v1179 = vrot.slane %v1178, 4
      %v1180 = vadd.f32 %v1178, %v1179
      %v1181 = vrot.slane %v1180, 2
      %v1182 = vadd.f32 %v1180, %v1181
      %v1183 = vrot.slane %v1182, 1
      %v1184 = vadd.f32 %v1182, %v1183
      %s1185 = vtos %v1184
      %v1186 = vstv %s1185
      %v1187 = vadd.f32 %v1173, %v1186
      %1188 = vst [vmem:[#allocation12] sm:$0xff] %v1187
      %v1189 = vld [vmem:[#allocation14] sm:$0xff]
      %v1190 = vsel %vm1143, %v1149, 0.0
      %v1191 = vsel %vm1175, %v1190, 0.0
      %1192 = vadd.xlane.f32.xlu0 %v1191
      %v1193 = vpop.xlane.xlu0 %1192
      %v1194 = vrot.slane %v1193, 4
      %v1195 = vadd.f32 %v1193, %v1194
      %v1196 = vrot.slane %v1195, 2
      %v1197 = vadd.f32 %v1195, %v1196
      %v1198 = vrot.slane %v1197, 1
      %v1199 = vadd.f32 %v1197, %v1198
      %s1200 = vtos %v1199
      %v1201 = vstv %s1200
      %v1202 = vadd.f32 %v1189, %v1201
      %1203 = vst [vmem:[#allocation14] sm:$0xff] %v1202
    $region57: #{tpu_custom_call.1} parent=1 // pred_fallthru
      _
    // Predicated region
    $region58: #{tpu_custom_call.1} parent=1 // pred_check
      %p1204 = pneg %p84
    $region59: #{tpu_custom_call.1} parent=1 // pred_check_branch
      %1206 = sbr.rel (%p1204) target = $region61
    $region60: #{tpu_custom_call.1} parent=1 // pred_region
      %v1207 = vld [vmem:[%s4] sm:$0x1]
      %v1208 = vld [vmem:[%s5] sm:$0x1]
      %v1209 = vmax.f32 %v1208, 0.0
      %v1210 = vand.u32 2147483647, %v1208
      %v1211 = vsub.f32 0.0, %v1210
      %v1212 = vmul.f32 %v1211, 1.442695
      %v1213 = vpow.pop %v1212
      %v1214 = vadd.f32 %v1213, 1.0
      %v1215 = vlog2.pop %v1214
      %v1216 = vmul.f32 %v1215, 0.6931472
      %v1217 = vmul.f32 -0.5, %v1213
      %v1218 = vadd.f32 %v1217, 1.0
      %v1219 = vmul.f32 %v1218, %v1213
      %v1220 = vand.u32 2147483647, %v1213
      %vm1221 = vcmp.lt.f32.partialorder %v1220, 0.0004427343
      %v1222 = vsel %vm1221, %v1219, %v1216
      %v1223 = vadd.f32 %v1209, %v1222
      %v1224 = vld [vmem:[%s6] sm:$0x1]
      %v1225 = vmul.f32 %v1223, %v1224
      %v1226 = vadd.f32 %v1207, %v1225
      %v1227 = vld [vmem:[#allocation2] sm:$0xff]
      %v1229 = vlaneseq
      %v1230 = vshrl.u32 %v1229, 7
      %v1231 = vsub.s32 0, %v1230
      %v1232 = vrot.slane %v1226, %v1231
      %v1234 = vadd.f32 %v1227, %v1232
      %1235 = vst [vmem:[#allocation11] sm:$0xff] %v1234
    $region61: #{tpu_custom_call.1} parent=1 // pred_fallthru
      _
    // Predicated region
    $region62: #{tpu_custom_call.1} parent=1 // pred_check
      _
    $region63: #{tpu_custom_call.1} parent=1 // pred_check_branch
      %1237 = sbr.rel (0) target = $region65
    $region64: #{tpu_custom_call.1} parent=1 // pred_region
      %s1239 = ssub.s32 128, 128
      %1240 = vsyncadd [#allocation5], %s1239
      %s1242 = sshll.u32 [#allocation11], 4
      %s1243 = int_to_ptr.vmem [resolvable:$true] %s1242
      %1245 = dma.vmem_to_hbm [thread:$0]  %s1243, 128, %s7, [#allocation5]
    $region65: #{tpu_custom_call.1} parent=1 // pred_fallthru
      _
    // Predicated region
    $region66: #{tpu_custom_call.1} parent=1 // pred_check
      _
    $region67: #{tpu_custom_call.1} parent=1 // pred_check_branch
      %1247 = sbr.rel (0) target = $region69
    $region68: #{tpu_custom_call.1} parent=1 // pred_region
      %s1249 = ssub.s32 128, 128
      %1250 = vsyncadd [#allocation13], %s1249
      %s1252 = sshll.u32 [#allocation12], 4
      %s1253 = int_to_ptr.vmem [resolvable:$true] %s1252
      %1255 = dma.vmem_to_hbm [thread:$0]  %s1253, 128, %s8, [#allocation13]
    $region69: #{tpu_custom_call.1} parent=1 // pred_fallthru
      _
    // Predicated region
    $region70: #{tpu_custom_call.1} parent=1 // pred_check
      _
    $region71: #{tpu_custom_call.1} parent=1 // pred_check_branch
      %1257 = sbr.rel (0) target = $region73
    $region72: #{tpu_custom_call.1} parent=1 // pred_region
      %s1259 = ssub.s32 128, 128
      %1260 = vsyncadd [#allocation13], %s1259
      %s1262 = sshll.u32 [#allocation14], 4
      %s1263 = int_to_ptr.vmem [resolvable:$true] %s1262
      %1265 = dma.vmem_to_hbm [thread:$0]  %s1263, 128, %s9, [#allocation13]
    $region73: #{tpu_custom_call.1} parent=1 // pred_fallthru
      _
    // Predicated region
    $region74: #{tpu_custom_call.1} parent=1 // pred_check
      _
    $region75: #{tpu_custom_call.1} parent=1 // pred_check_branch
      %1267 = sbr.rel (0) target = $region77
    $region76: #{tpu_custom_call.1} parent=1 // pred_region
      %1268 = dma.done [#allocation5], 128
    $region77: #{tpu_custom_call.1} parent=1 // pred_fallthru
      _
    // Predicated region
    $region78: #{tpu_custom_call.1} parent=1 // pred_check
      _
    $region79: #{tpu_custom_call.1} parent=1 // pred_check_branch
      %1270 = sbr.rel (0) target = $region81
    $region80: #{tpu_custom_call.1} parent=1 // pred_region
      %1271 = dma.done [#allocation13], 128
    $region81: #{tpu_custom_call.1} parent=1 // pred_fallthru
      _
    // Predicated region
    $region82: #{tpu_custom_call.1} parent=1 // pred_check
      _
    $region83: #{tpu_custom_call.1} parent=1 // pred_check_branch
      %1273 = sbr.rel (0) target = $region85
    $region84: #{tpu_custom_call.1} parent=1 // pred_region
      %1274 = dma.done [#allocation13], 128
    $region85: #{tpu_custom_call.1} parent=1 // pred_fallthru
      _
    %1275 = vsyncpa [#allocation4], 1
    %1276 = vsyncpa [#allocation7], 1
    %1277 = vsyncpa [#allocation10], 1
    %1278 = vsyncpa [#allocation5], 1
    %1279 = vsyncpa [#allocation13], 1

</llo_original>
